<compile_context>
chip_gen: v7x
topology: tpu7x:2x2x1
jax: 0.10.0
libtpu: 0.0.40
codegen_flags: <defaults>
</compile_context>

<pallas_src>
import functools

import jax
import jax.numpy as jnp
from jax.experimental import pallas as pl
from jax.experimental.pallas import tpu as pltpu

_COMPUTE_DTYPE = jnp.bfloat16          # MXU operand / activation streaming dtype


# --------------------------------- kernel -----------------------------------

def _dpa_kernel(z_ref, t_ref, bias_ref,
                wq_ref, wkv_ref, wo_ref, bo_ref,
                hsum_ref, hexp_ref, out_ref,
                *, n_templ, tile_i, n_res, c_z, c_t, c_hidden, no_heads):
    """One block of tile_i query rows: per-position attention over templates."""
    p = tile_i * n_res                      # query positions in this block
    hc = no_heads * c_hidden
    cdt = _COMPUTE_DTYPE

    zb = z_ref[...].reshape(p, c_z)                     # bf16 [P, C_z]
    tb = t_ref[...].reshape(n_templ * p, c_t)           # bf16 [S*P, C_t]

    # Projections.  wq already carries the 1/sqrt(c_hidden) scale; wkv is the
    # fused [C_t, 2*H*Ch] K/V weight, so t is swept through the MXU once.
    q = jnp.dot(zb, wq_ref[...], preferred_element_type=jnp.float32)      # [P, HC]
    kv = jnp.dot(tb, wkv_ref[...], preferred_element_type=jnp.float32)    # [S*P, 2HC]
    k3 = kv[:, :hc].reshape(n_templ, p, hc)                               # [S, P, HC]
    v_all = kv[:, hc:]                                                    # [S*P, HC]

    # Batched per-head logit reduction on the MXU: (q*k) @ hsum -> [S*P, H].
    qk = (k3 * q[None]).astype(cdt).reshape(n_templ * p, hc)
    logits = jnp.dot(qk, hsum_ref[...], preferred_element_type=jnp.float32)
    logits = logits.reshape(n_templ, p, no_heads) + bias_ref[...]         # [S, P, H]

    # Softmax over the (small) template axis.  Max/sum over S are unrolled VPU
    # ops; the head->channel broadcast of the weights stays on the MXU (hexp).
    m = logits[0]
    for s in range(1, n_templ):
        m = jnp.maximum(m, logits[s])
    e = jnp.exp(logits - m[None])                                         # [S, P, H]
    den = e[0]
    for s in range(1, n_templ):
        den = den + e[s]
    a = (e * pl.reciprocal(den, approx=True)[None]).astype(cdt)           # [S, P, H]

    w_all = jnp.dot(a.reshape(n_templ * p, no_heads), hexp_ref[...],
                    preferred_element_type=jnp.float32)                   # [S*P, HC]
    wv_p = (w_all * v_all).reshape(n_templ, p, hc)
    o = wv_p[0]
    for s in range(1, n_templ):
        o = o + wv_p[s]                                                   # [P, HC]

    out = jnp.dot(o.astype(cdt), wo_ref[...],
                  preferred_element_type=jnp.float32) + bo_ref[...]       # [P, C_z]
    out_ref[...] = out.reshape(tile_i, n_res, c_z).astype(out_ref.dtype)


# -------------------------------- wrapper ------------------------------------

def _const_spec(a):
    nd = a.ndim
    return pl.BlockSpec(tuple(a.shape), lambda i, _nd=nd: (0,) * _nd)


def _vmem_capacity_bytes():
    try:
        cap = getattr(pltpu.get_tpu_info(), "vmem_capacity_bytes", None)
        if cap:
            return int(cap)
    except Exception:
        pass
    return 64 * 1024 * 1024            # conservative (v7x-sized) fallback


def _estimate_vmem_bytes(tile, *, n_res, n_templ, c_t, c_z, c_hidden, no_heads):
    """Per-step VMEM footprint: double-buffered blocks + live temporaries."""
    p = tile * n_res
    sp = n_templ * p
    hc = no_heads * c_hidden
    bf, f32 = 2, 4
    lane = 128                                     # narrow [., H] values lane-pad
    io = 2 * (p * c_z * bf + sp * c_t * bf + p * c_z * f32)
    consts = 2 * ((c_z * hc + 2 * c_t * hc + hc * c_z
                   + 2 * hc * no_heads) * bf + (c_z + n_templ * no_heads) * f32)
    live = (p * hc * f32                           # q
            + 2 * sp * 2 * hc * f32                # kv + worst-case k/v slice copies
            + sp * hc * (f32 + bf)                 # q*k product (+ bf16 copy)
            + 2 * sp * lane * f32                  # logits / e / a ([., H] padded)
            + sp * hc * (f32 + bf)                 # broadcast weights + bf16 a
            + sp * hc * f32                        # w*v product
            + 2 * p * hc * f32                     # o accumulation
            + p * c_z * f32)                       # out value
    return io + consts + live


def _pick_tile_i(n_res, n_templ, c_t, c_z, c_hidden, no_heads, budget_bytes):
    """Largest divisor of n_res that fits the budget AND keeps >= 8 grid steps
    (so both v7x TensorCores get work and the pipeline can prefetch)."""
    max_tile = max(1, n_res // 8)
    best = 1
    for tile in range(1, max_tile + 1):
        if n_res % tile:
            continue
        if _estimate_vmem_bytes(tile, n_res=n_res, n_templ=n_templ, c_t=c_t,
                                c_z=c_z, c_hidden=c_hidden,
                                no_heads=no_heads) <= budget_bytes:
            best = tile
    return best


def decoy_pointwise_attention(t, z, template_mask, params, *, c_hidden, no_heads,
                              inf, tile_i=None, vmem_limit_bytes=None,
                              t_buffers=2):
    """Forward pass of DecoyPointwiseAttention (returns the pair update)."""
    n_templ, n_res, _, c_t = t.shape
    c_z = z.shape[-1]
    out_dtype = z.dtype
    cdt = _COMPUTE_DTYPE

    if n_res % 8 != 0:
        raise ValueError(f"n_res={n_res} must be a multiple of 8 (sublane tile)")

    # Stream the big activations in bf16: halves the dominant HBM stream (t).
    t_in = t.astype(cdt)
    z_in = z.astype(cdt)

    if template_mask is None:
        template_mask = jnp.ones((n_templ,), jnp.float32)
    bias = inf * (template_mask.astype(jnp.float32) - 1.0)                   # [S]
    bias_arr = jnp.tile(bias.reshape(n_templ, 1, 1), (1, 1, no_heads))       # [S,1,H]

    # Pre-stacked / pre-cast weights: fused K/V, q-scale folded into wq, 0/1
    # head-sum / head-expand helpers (bf16 operands, f32 accumulation).
    scale = 1.0 / (c_hidden ** 0.5)
    wq = (params['wq'] * scale).astype(cdt)                                  # [C_z, HC]
    wkv = jnp.concatenate([params['wk'], params['wv']], axis=1).astype(cdt)  # [C_t, 2HC]
    wo = params['wo'].astype(cdt)                                            # [HC, C_z]
    bo = params['bo'].reshape(1, c_z).astype(jnp.float32)                    # [1, C_z]
    eye = jnp.eye(no_heads, dtype=jnp.float32)
    hsum = jnp.repeat(eye, c_hidden, axis=0).astype(cdt)                     # [HC, H]
    hexp = jnp.repeat(eye, c_hidden, axis=1).astype(cdt)                     # [H, HC]

    # Generation-aware VMEM budgeting (v5e/v6e: 128 MiB, v7x: 64 MiB per core).
    if vmem_limit_bytes is None:
        vmem_limit_bytes = int(0.75 * _vmem_capacity_bytes())
    if tile_i is None:
        tile_i = _pick_tile_i(n_res, n_templ, c_t, c_z, c_hidden, no_heads,
                              int(0.85 * vmem_limit_bytes))
    elif n_res % tile_i != 0:
        raise ValueError(f"tile_i={tile_i} must divide n_res={n_res} "
                         "(remainder rows would be silently dropped)")

    kernel = functools.partial(
        _dpa_kernel, n_templ=n_templ, tile_i=tile_i, n_res=n_res,
        c_z=c_z, c_t=c_t, c_hidden=c_hidden, no_heads=no_heads)

    t_spec_kwargs = {}
    if t_buffers != 2:
        # Deeper buffering of the dominant t stream; only use where VMEM
        # headroom exists (v5e/v6e), not recommended on v7x.
        t_spec_kwargs = dict(pipeline_mode=pl.Buffered(t_buffers))

    grid = (n_res // tile_i,)
    in_specs = [
        pl.BlockSpec((tile_i, n_res, c_z), lambda i: (i, 0, 0)),                 # z rows
        pl.BlockSpec((n_templ, tile_i, n_res, c_t), lambda i: (0, i, 0, 0),
                     **t_spec_kwargs),                                           # t rows
        _const_spec(bias_arr),
        _const_spec(wq), _const_spec(wkv), _const_spec(wo), _const_spec(bo),
        _const_spec(hsum), _const_spec(hexp),
    ]
    out_specs = pl.BlockSpec((tile_i, n_res, c_z), lambda i: (i, 0, 0))

    return pl.pallas_call(
        kernel,
        out_shape=jax.ShapeDtypeStruct((n_res, n_res, c_z), out_dtype),
        grid=grid,
        in_specs=in_specs,
        out_specs=out_specs,
        compiler_params=pltpu.CompilerParams(
            dimension_semantics=("parallel",),
            vmem_limit_bytes=vmem_limit_bytes),
    )(z_in, t_in, bias_arr, wq, wkv, wo, bo, hsum, hexp)


# --------------------------- reference & params -------------------------------

def _reference(t, z, template_mask, params, *, c_hidden, no_heads, inf):
    s, n, _, _ = t.shape
    h, ch = no_heads, c_hidden
    bias = inf * (template_mask.astype(jnp.float32) - 1.0)                # [S]
    q = jnp.einsum('ijc,cd->ijd', z, params['wq'],
                   precision='highest') * (ch ** -0.5)
    k = jnp.einsum('sijc,cd->sijd', t, params['wk'], precision='highest')
    v = jnp.einsum('sijc,cd->sijd', t, params['wv'], precision='highest')
    qh = q.reshape(n, n, h, ch)
    kh = k.reshape(s, n, n, h, ch)
    vh = v.reshape(s, n, n, h, ch)
    logits = jnp.einsum('ijhc,sijhc->ijhs', qh, kh, precision='highest')
    logits = logits + bias[None, None, None, :]
    a = jax.nn.softmax(logits, axis=-1)
    o = jnp.einsum('ijhs,sijhc->ijhc', a, vh, precision='highest')
    o = o.reshape(n, n, h * ch)
    return jnp.dot(o, params['wo'], precision='highest') + params['bo'][0]


def init_params(key, c_t, c_z, c_hidden, no_heads):
    hc = no_heads * c_hidden
    ks = jax.random.split(key, 5)

    def w(k, shape, fan_in):
        return jax.random.normal(k, shape, jnp.float32) / jnp.sqrt(float(fan_in))

    return dict(
        wq=w(ks[0], (c_z, hc), c_z),       # linear_q (no bias)
        wk=w(ks[1], (c_t, hc), c_t),       # linear_k (no bias)
        wv=w(ks[2], (c_t, hc), c_t),       # linear_v (no bias)
        wo=w(ks[3], (hc, c_z), hc),        # linear_o weight
        bo=0.05 * jax.random.normal(ks[4], (1, c_z), jnp.float32),  # linear_o bias
    )


# ----------------------------------- main -------------------------------------

if __name__ == "__main__":
    N_TEMPL, N_RES = 4, 16
    C_T, C_Z, C_HIDDEN, NO_HEADS = 16, 32, 16, 4
    INF = 1e9

    key = jax.random.PRNGKey(0)
    kt, kz, kp = jax.random.split(key, 3)
    t = jax.random.normal(kt, (N_TEMPL, N_RES, N_RES, C_T), jnp.float32)
    z = jax.random.normal(kz, (N_RES, N_RES, C_Z), jnp.float32)
    template_mask = jnp.array([1.0, 1.0, 0.0, 1.0], jnp.float32)  # one masked templ
    params = init_params(kp, C_T, C_Z, C_HIDDEN, NO_HEADS)

    fwd = jax.jit(functools.partial(
        decoy_pointwise_attention, c_hidden=C_HIDDEN, no_heads=NO_HEADS, inf=INF))
    out = fwd(t, z, template_mask, params)
    jax.block_until_ready(out)

    ref = _reference(t, z, template_mask, params,
                     c_hidden=C_HIDDEN, no_heads=NO_HEADS, inf=INF)

    assert out.shape == (N_RES, N_RES, C_Z)
    assert bool(jnp.all(jnp.isfinite(out)))
    max_err = float(jnp.max(jnp.abs(out - ref)))
    # bf16 activation streaming + bf16 MXU operands + approx reciprocal give
    # ~1e-2-level deviations vs the fp32 reference (intentional inference trade).
    assert max_err < 2e-1, f"max abs err vs reference: {max_err}"
    print("KERNEL_OK")
</pallas_src>

<mosaic_0001>
module attributes {stable_mosaic.version = 11 : i64} {
  func.func @_dpa_kernel(%arg0: i32, %arg1: memref<2x16x32xbf16, #tpu.memory_space<vmem>>, %arg2: memref<4x2x16x16xbf16, #tpu.memory_space<vmem>>, %arg3: memref<4x1x4xf32, #tpu.memory_space<vmem>>, %arg4: memref<32x64xbf16, #tpu.memory_space<vmem>>, %arg5: memref<16x128xbf16, #tpu.memory_space<vmem>>, %arg6: memref<64x32xbf16, #tpu.memory_space<vmem>>, %arg7: memref<1x32xf32, #tpu.memory_space<vmem>>, %arg8: memref<64x4xbf16, #tpu.memory_space<vmem>>, %arg9: memref<4x64xbf16, #tpu.memory_space<vmem>>, %arg10: memref<2x16x32xf32, #tpu.memory_space<vmem>>) attributes {dimension_semantics = [#tpu.dimension_semantics<parallel>], iteration_bounds = array<i64: 8>, scalar_prefetch = 0 : i64, scratch_operands = 0 : i64, tpu.core_type = #tpu.core_type<tc>, window_params = [{transform_indices = @transform_0, window_bounds = array<i64: 2, 16, 32>}, {transform_indices = @transform_1, window_bounds = array<i64: 4, 2, 16, 16>}, {pipeline_mode = #tpu.pipeline_mode<synchronous>, transform_indices = @transform_2, window_bounds = array<i64: 4, 1, 4>}, {pipeline_mode = #tpu.pipeline_mode<synchronous>, transform_indices = @transform_3, window_bounds = array<i64: 32, 64>}, {pipeline_mode = #tpu.pipeline_mode<synchronous>, transform_indices = @transform_4, window_bounds = array<i64: 16, 128>}, {pipeline_mode = #tpu.pipeline_mode<synchronous>, transform_indices = @transform_5, window_bounds = array<i64: 64, 32>}, {pipeline_mode = #tpu.pipeline_mode<synchronous>, transform_indices = @transform_6, window_bounds = array<i64: 1, 32>}, {pipeline_mode = #tpu.pipeline_mode<synchronous>, transform_indices = @transform_7, window_bounds = array<i64: 64, 4>}, {pipeline_mode = #tpu.pipeline_mode<synchronous>, transform_indices = @transform_8, window_bounds = array<i64: 4, 64>}, {transform_indices = @transform_9, window_bounds = array<i64: 2, 16, 32>}]} {
    %c0 = arith.constant 0 : index
    %c0_0 = arith.constant 0 : index
    %c0_1 = arith.constant 0 : index
    %0 = vector.load %arg1[%c0, %c0_0, %c0_1] : memref<2x16x32xbf16, #tpu.memory_space<vmem>>, vector<2x16x32xbf16>
    %1 = vector.shape_cast %0 : vector<2x16x32xbf16> to vector<32x32xbf16>
    %c0_2 = arith.constant 0 : index
    %c0_3 = arith.constant 0 : index
    %c0_4 = arith.constant 0 : index
    %c0_5 = arith.constant 0 : index
    %2 = vector.load %arg2[%c0_2, %c0_3, %c0_4, %c0_5] : memref<4x2x16x16xbf16, #tpu.memory_space<vmem>>, vector<4x2x16x16xbf16>
    %3 = vector.shape_cast %2 : vector<4x2x16x16xbf16> to vector<128x16xbf16>
    %c0_6 = arith.constant 0 : index
    %c0_7 = arith.constant 0 : index
    %4 = vector.load %arg4[%c0_6, %c0_7] : memref<32x64xbf16, #tpu.memory_space<vmem>>, vector<32x64xbf16>
    %cst = arith.constant dense<0.000000e+00> : vector<32x64xf32>
    %5 = tpu.matmul %1, %4, %cst {dimension_numbers = #tpu.dot_dimension_numbers<[1], [0], [0], [1], [0, 0, 1, 1], [], []>} : vector<32x32xbf16>, vector<32x64xbf16>, vector<32x64xf32> -> vector<32x64xf32>
    %c0_8 = arith.constant 0 : index
    %c0_9 = arith.constant 0 : index
    %6 = vector.load %arg5[%c0_8, %c0_9] : memref<16x128xbf16, #tpu.memory_space<vmem>>, vector<16x128xbf16>
    %cst_10 = arith.constant dense<0.000000e+00> : vector<128x128xf32>
    %7 = tpu.matmul %3, %6, %cst_10 {dimension_numbers = #tpu.dot_dimension_numbers<[1], [0], [0], [1], [0, 0, 1, 1], [], []>} : vector<128x16xbf16>, vector<16x128xbf16>, vector<128x128xf32> -> vector<128x128xf32>
    %8 = vector.extract_strided_slice %7 {offsets = [0, 0], sizes = [128, 64], strides = [1, 1]} : vector<128x128xf32> to vector<128x64xf32>
    %9 = vector.shape_cast %8 : vector<128x64xf32> to vector<4x32x64xf32>
    %10 = vector.extract_strided_slice %7 {offsets = [0, 64], sizes = [128, 64], strides = [1, 1]} : vector<128x128xf32> to vector<128x64xf32>
    %11 = vector.shape_cast %5 : vector<32x64xf32> to vector<1x32x64xf32>
    %12 = vector.broadcast %11 : vector<1x32x64xf32> to vector<4x32x64xf32>
    %13 = arith.mulf %9, %12 : vector<4x32x64xf32>
    %14 = arith.truncf %13 : vector<4x32x64xf32> to vector<4x32x64xbf16>
    %15 = vector.shape_cast %14 : vector<4x32x64xbf16> to vector<128x64xbf16>
    %c0_11 = arith.constant 0 : index
    %c0_12 = arith.constant 0 : index
    %16 = vector.load %arg8[%c0_11, %c0_12] : memref<64x4xbf16, #tpu.memory_space<vmem>>, vector<64x4xbf16>
    %cst_13 = arith.constant dense<0.000000e+00> : vector<128x4xf32>
    %17 = tpu.matmul %15, %16, %cst_13 {dimension_numbers = #tpu.dot_dimension_numbers<[1], [0], [0], [1], [0, 0, 1, 1], [], []>} : vector<128x64xbf16>, vector<64x4xbf16>, vector<128x4xf32> -> vector<128x4xf32>
    %18 = vector.shape_cast %17 : vector<128x4xf32> to vector<4x32x4xf32>
    %c0_14 = arith.constant 0 : index
    %c0_15 = arith.constant 0 : index
    %c0_16 = arith.constant 0 : index
    %19 = vector.load %arg3[%c0_14, %c0_15, %c0_16] : memref<4x1x4xf32, #tpu.memory_space<vmem>>, vector<4x1x4xf32>
    %20 = vector.broadcast %19 : vector<4x1x4xf32> to vector<4x32x4xf32>
    %21 = arith.addf %18, %20 : vector<4x32x4xf32>
    %22 = vector.extract_strided_slice %21 {offsets = [0, 0, 0], sizes = [1, 32, 4], strides = [1, 1, 1]} : vector<4x32x4xf32> to vector<1x32x4xf32>
    %23 = vector.shape_cast %22 : vector<1x32x4xf32> to vector<32x4xf32>
    %24 = vector.extract_strided_slice %21 {offsets = [1, 0, 0], sizes = [1, 32, 4], strides = [1, 1, 1]} : vector<4x32x4xf32> to vector<1x32x4xf32>
    %25 = vector.shape_cast %24 : vector<1x32x4xf32> to vector<32x4xf32>
    %26 = arith.maximumf %23, %25 : vector<32x4xf32>
    %27 = vector.extract_strided_slice %21 {offsets = [2, 0, 0], sizes = [1, 32, 4], strides = [1, 1, 1]} : vector<4x32x4xf32> to vector<1x32x4xf32>
    %28 = vector.shape_cast %27 : vector<1x32x4xf32> to vector<32x4xf32>
    %29 = arith.maximumf %26, %28 : vector<32x4xf32>
    %30 = vector.extract_strided_slice %21 {offsets = [3, 0, 0], sizes = [1, 32, 4], strides = [1, 1, 1]} : vector<4x32x4xf32> to vector<1x32x4xf32>
    %31 = vector.shape_cast %30 : vector<1x32x4xf32> to vector<32x4xf32>
    %32 = arith.maximumf %29, %31 : vector<32x4xf32>
    %33 = vector.shape_cast %32 : vector<32x4xf32> to vector<1x32x4xf32>
    %34 = vector.broadcast %33 : vector<1x32x4xf32> to vector<4x32x4xf32>
    %35 = arith.subf %21, %34 : vector<4x32x4xf32>
    %36 = math.exp %35 : vector<4x32x4xf32>
    %37 = vector.extract_strided_slice %36 {offsets = [0, 0, 0], sizes = [1, 32, 4], strides = [1, 1, 1]} : vector<4x32x4xf32> to vector<1x32x4xf32>
    %38 = vector.shape_cast %37 : vector<1x32x4xf32> to vector<32x4xf32>
    %39 = vector.extract_strided_slice %36 {offsets = [1, 0, 0], sizes = [1, 32, 4], strides = [1, 1, 1]} : vector<4x32x4xf32> to vector<1x32x4xf32>
    %40 = vector.shape_cast %39 : vector<1x32x4xf32> to vector<32x4xf32>
    %41 = arith.addf %38, %40 : vector<32x4xf32>
    %42 = vector.extract_strided_slice %36 {offsets = [2, 0, 0], sizes = [1, 32, 4], strides = [1, 1, 1]} : vector<4x32x4xf32> to vector<1x32x4xf32>
    %43 = vector.shape_cast %42 : vector<1x32x4xf32> to vector<32x4xf32>
    %44 = arith.addf %41, %43 : vector<32x4xf32>
    %45 = vector.extract_strided_slice %36 {offsets = [3, 0, 0], sizes = [1, 32, 4], strides = [1, 1, 1]} : vector<4x32x4xf32> to vector<1x32x4xf32>
    %46 = vector.shape_cast %45 : vector<1x32x4xf32> to vector<32x4xf32>
    %47 = arith.addf %44, %46 : vector<32x4xf32>
    %48 = tpu.reciprocal %47 {approx = true} : vector<32x4xf32> -> vector<32x4xf32>
    %49 = vector.shape_cast %48 : vector<32x4xf32> to vector<1x32x4xf32>
    %50 = vector.broadcast %49 : vector<1x32x4xf32> to vector<4x32x4xf32>
    %51 = arith.mulf %36, %50 : vector<4x32x4xf32>
    %52 = arith.truncf %51 : vector<4x32x4xf32> to vector<4x32x4xbf16>
    %53 = vector.shape_cast %52 : vector<4x32x4xbf16> to vector<128x4xbf16>
    %c0_17 = arith.constant 0 : index
    %c0_18 = arith.constant 0 : index
    %54 = vector.load %arg9[%c0_17, %c0_18] : memref<4x64xbf16, #tpu.memory_space<vmem>>, vector<4x64xbf16>
    %cst_19 = arith.constant dense<0.000000e+00> : vector<128x64xf32>
    %55 = tpu.matmul %53, %54, %cst_19 {dimension_numbers = #tpu.dot_dimension_numbers<[1], [0], [0], [1], [0, 0, 1, 1], [], []>} : vector<128x4xbf16>, vector<4x64xbf16>, vector<128x64xf32> -> vector<128x64xf32>
    %56 = arith.mulf %55, %10 : vector<128x64xf32>
    %57 = vector.shape_cast %56 : vector<128x64xf32> to vector<4x32x64xf32>
    %58 = vector.extract_strided_slice %57 {offsets = [0, 0, 0], sizes = [1, 32, 64], strides = [1, 1, 1]} : vector<4x32x64xf32> to vector<1x32x64xf32>
    %59 = vector.shape_cast %58 : vector<1x32x64xf32> to vector<32x64xf32>
    %60 = vector.extract_strided_slice %57 {offsets = [1, 0, 0], sizes = [1, 32, 64], strides = [1, 1, 1]} : vector<4x32x64xf32> to vector<1x32x64xf32>
    %61 = vector.shape_cast %60 : vector<1x32x64xf32> to vector<32x64xf32>
    %62 = arith.addf %59, %61 : vector<32x64xf32>
    %63 = vector.extract_strided_slice %57 {offsets = [2, 0, 0], sizes = [1, 32, 64], strides = [1, 1, 1]} : vector<4x32x64xf32> to vector<1x32x64xf32>
    %64 = vector.shape_cast %63 : vector<1x32x64xf32> to vector<32x64xf32>
    %65 = arith.addf %62, %64 : vector<32x64xf32>
    %66 = vector.extract_strided_slice %57 {offsets = [3, 0, 0], sizes = [1, 32, 64], strides = [1, 1, 1]} : vector<4x32x64xf32> to vector<1x32x64xf32>
    %67 = vector.shape_cast %66 : vector<1x32x64xf32> to vector<32x64xf32>
    %68 = arith.addf %65, %67 : vector<32x64xf32>
    %69 = arith.truncf %68 : vector<32x64xf32> to vector<32x64xbf16>
    %c0_20 = arith.constant 0 : index
    %c0_21 = arith.constant 0 : index
    %70 = vector.load %arg6[%c0_20, %c0_21] : memref<64x32xbf16, #tpu.memory_space<vmem>>, vector<64x32xbf16>
    %cst_22 = arith.constant dense<0.000000e+00> : vector<32x32xf32>
    %71 = tpu.matmul %69, %70, %cst_22 {dimension_numbers = #tpu.dot_dimension_numbers<[1], [0], [0], [1], [0, 0, 1, 1], [], []>} : vector<32x64xbf16>, vector<64x32xbf16>, vector<32x32xf32> -> vector<32x32xf32>
    %c0_23 = arith.constant 0 : index
    %c0_24 = arith.constant 0 : index
    %72 = vector.load %arg7[%c0_23, %c0_24] : memref<1x32xf32, #tpu.memory_space<vmem>>, vector<1x32xf32>
    %73 = vector.broadcast %72 : vector<1x32xf32> to vector<32x32xf32>
    %74 = arith.addf %71, %73 : vector<32x32xf32>
    %75 = vector.shape_cast %74 : vector<32x32xf32> to vector<2x16x32xf32>
    %c0_25 = arith.constant 0 : index
    %c0_26 = arith.constant 0 : index
    %c0_27 = arith.constant 0 : index
    %76 = vector.load %arg10[%c0_25, %c0_26, %c0_27] : memref<2x16x32xf32, #tpu.memory_space<vmem>>, vector<2x16x32xf32>
    tpu.vector_store %arg10[%c0_25, %c0_26, %c0_27], %75 {strides = array<i32>} : memref<2x16x32xf32, #tpu.memory_space<vmem>>, vector<2x16x32xf32>,
    return
  }
  func.func @transform_0(%arg0: i32) -> (i32, i32, i32) {
    %c0_i32 = arith.constant 0 : i32
    %c0_i32_0 = arith.constant 0 : i32
    %c0_i32_1 = arith.constant 0 : i32
    return %arg0, %c0_i32, %c0_i32_0 : i32, i32, i32
  }
  func.func @transform_1(%arg0: i32) -> (i32, i32, i32, i32) {
    %c0_i32 = arith.constant 0 : i32
    %c0_i32_0 = arith.constant 0 : i32
    %c0_i32_1 = arith.constant 0 : i32
    %c0_i32_2 = arith.constant 0 : i32
    return %c0_i32, %arg0, %c0_i32_0, %c0_i32_1 : i32, i32, i32, i32
  }
  func.func @transform_2(%arg0: i32) -> (i32, i32, i32) {
    %c0_i32 = arith.constant 0 : i32
    %c0_i32_0 = arith.constant 0 : i32
    %c0_i32_1 = arith.constant 0 : i32
    %c0_i32_2 = arith.constant 0 : i32
    return %c0_i32, %c0_i32_0, %c0_i32_1 : i32, i32, i32
  }
  func.func @transform_3(%arg0: i32) -> (i32, i32) {
    %c0_i32 = arith.constant 0 : i32
    %c0_i32_0 = arith.constant 0 : i32
    %c0_i32_1 = arith.constant 0 : i32
    return %c0_i32, %c0_i32_0 : i32, i32
  }
  func.func @transform_4(%arg0: i32) -> (i32, i32) {
    %c0_i32 = arith.constant 0 : i32
    %c0_i32_0 = arith.constant 0 : i32
    %c0_i32_1 = arith.constant 0 : i32
    return %c0_i32, %c0_i32_0 : i32, i32
  }
  func.func @transform_5(%arg0: i32) -> (i32, i32) {
    %c0_i32 = arith.constant 0 : i32
    %c0_i32_0 = arith.constant 0 : i32
    %c0_i32_1 = arith.constant 0 : i32
    return %c0_i32, %c0_i32_0 : i32, i32
  }
  func.func @transform_6(%arg0: i32) -> (i32, i32) {
    %c0_i32 = arith.constant 0 : i32
    %c0_i32_0 = arith.constant 0 : i32
    %c0_i32_1 = arith.constant 0 : i32
    return %c0_i32, %c0_i32_0 : i32, i32
  }
  func.func @transform_7(%arg0: i32) -> (i32, i32) {
    %c0_i32 = arith.constant 0 : i32
    %c0_i32_0 = arith.constant 0 : i32
    %c0_i32_1 = arith.constant 0 : i32
    return %c0_i32, %c0_i32_0 : i32, i32
  }
  func.func @transform_8(%arg0: i32) -> (i32, i32) {
    %c0_i32 = arith.constant 0 : i32
    %c0_i32_0 = arith.constant 0 : i32
    %c0_i32_1 = arith.constant 0 : i32
    return %c0_i32, %c0_i32_0 : i32, i32
  }
  func.func @transform_9(%arg0: i32) -> (i32, i32, i32) {
    %c0_i32 = arith.constant 0 : i32
    %c0_i32_0 = arith.constant 0 : i32
    %c0_i32_1 = arith.constant 0 : i32
    return %arg0, %c0_i32, %c0_i32_0 : i32, i32, i32
  }
}

</mosaic_0001>

<llo_original>
// kernel: decoy_pointwise_attention.1
$region0: #{decoy_pointwise_attention.1}
  #allocation0 [shape = 'u32[]', space=smem, size = 0x4, offset = 0x4, fixed_abs, tag = 'smem constant byte address 0x4 - core index']
  #allocation1 [shape = 'u32[144,128]{1,0:T(1,128)}', space=vmem, size = 0x12000, scoped, tag = 'internal scratch']
  %s0 = inlined_call_operand.vmem [shape: bf16[16,16,32], index: 0, kind: input, shape index: {}]
  %s1 = inlined_call_operand.vmem [shape: bf16[4,16,16,16], index: 1, kind: input, shape index: {}]
  %s2 = inlined_call_operand.vmem [shape: f32[4,1,4], index: 2, kind: input, shape index: {}]
  %s3 = inlined_call_operand.vmem [shape: bf16[32,64], index: 3, kind: input, shape index: {}]
  %s4 = inlined_call_operand.vmem [shape: bf16[16,128], index: 4, kind: input, shape index: {}]
  %s5 = inlined_call_operand.vmem [shape: bf16[64,32], index: 5, kind: input, shape index: {}]
  %s6 = inlined_call_operand.vmem [shape: f32[1,32], index: 6, kind: input, shape index: {}]
  %s7 = inlined_call_operand.vmem [shape: bf16[64,4], index: 7, kind: input, shape index: {}]
  %s8 = inlined_call_operand.vmem [shape: bf16[4,64], index: 8, kind: input, shape index: {}]
  %s9 = inlined_call_operand.hbm [shape: f32[16,16,32], index: 9, kind: output, shape index: {}]
  %s10 = sld [smem:[#allocation0]]
  $region110: #{decoy_pointwise_attention.1} parent=0
    _
  %s12 = ssub.s32 1, %s10
  %s13 = scalar_select 0, %s12, %s10
  $region1: #{decoy_pointwise_attention.1} parent=0
    #allocation2 [shape = 'u8[65536]{0}', space=vmem, size = 0x10000, scoped, tag = 'input window, operand 1']
    #allocation3 [shape = 'u8[32768]{0}', space=vmem, size = 0x8000, scoped, tag = 'output window, operand 0']
    #allocation4 [shape = 's32[2]{0}', space=sflag, size = 0x8, scoped, tag = 'scoped memory for decoy_pointwise_attention.1']
    %14 = vsyncpa [#allocation4], 0
    %s15 = scalar_lea.sflag [#allocation4], 1
    %16 = vsyncpa %s15, 0
    loop: start=0, step=1, limit=10
    $region2: #{decoy_pointwise_attention.1} parent=1 // loop_pre_header
      _
    $region3: #{decoy_pointwise_attention.1} parent=1 // loop_header
      %s18 = sphi 0, %s22
      %p19 = scmp.ge.s32.totalorder %s18, 10
      %s28 = sphi 0, %s30
      %s31 = sphi 0, %s28
      %s32 = sphi 0, %s31
      %s48 = sphi 0, %s32
      %s54 = sphi 0, %s56
      %s57 = sphi 0, %s54
      %s58 = sphi 0, %s57
      %s74 = sphi 0, %s58
      %s78 = sphi 0, %s78
      %s80 = sphi 0, %s78
      %s81 = sphi 0, %s80
      %s95 = sphi 0, %s81
      %s99 = sphi 0, %s99
      %s101 = sphi 0, %s99
      %s102 = sphi 0, %s101
      %s116 = sphi 0, %s102
      %s120 = sphi 0, %s120
      %s122 = sphi 0, %s120
      %s123 = sphi 0, %s122
      %s137 = sphi 0, %s123
      %s141 = sphi 0, %s141
      %s143 = sphi 0, %s141
      %s144 = sphi 0, %s143
      %s158 = sphi 0, %s144
      %s162 = sphi 0, %s162
      %s164 = sphi 0, %s162
      %s165 = sphi 0, %s164
      %s179 = sphi 0, %s165
      %s183 = sphi 0, %s183
      %s185 = sphi 0, %s183
      %s186 = sphi 0, %s185
      %s200 = sphi 0, %s186
      %s204 = sphi 0, %s204
      %s206 = sphi 0, %s204
      %s207 = sphi 0, %s206
      %s221 = sphi 0, %s207
      %s227 = sphi 0, %s229
      %s230 = sphi 0, %s227
      %s231 = sphi 0, %s230
      %s247 = sphi 0, %s231
    $region4: #{decoy_pointwise_attention.1} parent=1 // loop_header_branch
      %21 = sbr.rel (%p19) target = $region8
    $region5: #{decoy_pointwise_attention.1} parent=1 // loop_body
      %s23 = ssub.s32 %s18, 1
      %s24 = ssub.s32 %s18, 2
      %s25 = sadd.s32 %s18, 1
      %s26 = ssub.s32 %s18, %s25
      %p27 = scmp.eq.s32.totalorder %s26, 0
      %s29 = sadd.s32 %s28, 1
      %s30 = scalar_select %p27, %s28, %s29
      %p33 = pneg %p27
      %p34 = scmp.eq.s32.totalorder %s18, 7
      %p35 = por %p33, %p34
      %p36 = scmp.ne.s32.totalorder %s28, %s31
      %p37 = scmp.eq.s32.totalorder %s18, 0
      %p38 = por %p36, %p37
      %p39 = scmp.ne.s32.totalorder %s28, %s31
      %p40 = scmp.eq.s32.totalorder %s23, 7
      %p41 = por %p39, %p40
      %p42 = scmp.ne.s32.totalorder %s31, %s32
      %p43 = scmp.eq.s32.totalorder %s23, 0
      %p44 = por %p42, %p43
      %p45 = scmp.ne.s32.totalorder %s31, %s32
      %p46 = scmp.eq.s32.totalorder %s24, 7
      %p47 = por %p45, %p46
      %p49 = scmp.ne.s32.totalorder %s32, %s48
      %p50 = scmp.eq.s32.totalorder %s24, 0
      %p51 = por %p49, %p50
      %s52 = ssub.s32 %s18, %s25
      %p53 = scmp.eq.s32.totalorder %s52, 0
      %s55 = sadd.s32 %s54, 1
      %s56 = scalar_select %p53, %s54, %s55
      %p59 = pneg %p53
      %p60 = scmp.eq.s32.totalorder %s18, 7
      %p61 = por %p59, %p60
      %p62 = scmp.ne.s32.totalorder %s54, %s57
      %p63 = scmp.eq.s32.totalorder %s18, 0
      %p64 = por %p62, %p63
      %p65 = scmp.ne.s32.totalorder %s54, %s57
      %p66 = scmp.eq.s32.totalorder %s23, 7
      %p67 = por %p65, %p66
      %p68 = scmp.ne.s32.totalorder %s57, %s58
      %p69 = scmp.eq.s32.totalorder %s23, 0
      %p70 = por %p68, %p69
      %p71 = scmp.ne.s32.totalorder %s57, %s58
      %p72 = scmp.eq.s32.totalorder %s24, 7
      %p73 = por %p71, %p72
      %p75 = scmp.ne.s32.totalorder %s58, %s74
      %p76 = scmp.eq.s32.totalorder %s24, 0
      %p77 = por %p75, %p76
      %s79 = sadd.s32 %s78, 1
      %p82 = scmp.eq.s32.totalorder %s18, 7
      %p83 = scmp.ne.s32.totalorder %s78, %s80
      %p84 = scmp.eq.s32.totalorder %s18, 0
      %p85 = por %p83, %p84
      %p86 = scmp.ne.s32.totalorder %s78, %s80
      %p87 = scmp.eq.s32.totalorder %s23, 7
      %p88 = por %p86, %p87
      %p89 = scmp.ne.s32.totalorder %s80, %s81
      %p90 = scmp.eq.s32.totalorder %s23, 0
      %p91 = por %p89, %p90
      %p92 = scmp.ne.s32.totalorder %s80, %s81
      %p93 = scmp.eq.s32.totalorder %s24, 7
      %p94 = por %p92, %p93
      %p96 = scmp.ne.s32.totalorder %s81, %s95
      %p97 = scmp.eq.s32.totalorder %s24, 0
      %p98 = por %p96, %p97
      %s100 = sadd.s32 %s99, 1
      %p103 = scmp.eq.s32.totalorder %s18, 7
      %p104 = scmp.ne.s32.totalorder %s99, %s101
      %p105 = scmp.eq.s32.totalorder %s18, 0
      %p106 = por %p104, %p105
      %p107 = scmp.ne.s32.totalorder %s99, %s101
      %p108 = scmp.eq.s32.totalorder %s23, 7
      %p109 = por %p107, %p108
      %p110 = scmp.ne.s32.totalorder %s101, %s102
      %p111 = scmp.eq.s32.totalorder %s23, 0
      %p112 = por %p110, %p111
      %p113 = scmp.ne.s32.totalorder %s101, %s102
      %p114 = scmp.eq.s32.totalorder %s24, 7
      %p115 = por %p113, %p114
      %p117 = scmp.ne.s32.totalorder %s102, %s116
      %p118 = scmp.eq.s32.totalorder %s24, 0
      %p119 = por %p117, %p118
      %s121 = sadd.s32 %s120, 1
      %p124 = scmp.eq.s32.totalorder %s18, 7
      %p125 = scmp.ne.s32.totalorder %s120, %s122
      %p126 = scmp.eq.s32.totalorder %s18, 0
      %p127 = por %p125, %p126
      %p128 = scmp.ne.s32.totalorder %s120, %s122
      %p129 = scmp.eq.s32.totalorder %s23, 7
      %p130 = por %p128, %p129
      %p131 = scmp.ne.s32.totalorder %s122, %s123
      %p132 = scmp.eq.s32.totalorder %s23, 0
      %p133 = por %p131, %p132
      %p134 = scmp.ne.s32.totalorder %s122, %s123
      %p135 = scmp.eq.s32.totalorder %s24, 7
      %p136 = por %p134, %p135
      %p138 = scmp.ne.s32.totalorder %s123, %s137
      %p139 = scmp.eq.s32.totalorder %s24, 0
      %p140 = por %p138, %p139
      %s142 = sadd.s32 %s141, 1
      %p145 = scmp.eq.s32.totalorder %s18, 7
      %p146 = scmp.ne.s32.totalorder %s141, %s143
      %p147 = scmp.eq.s32.totalorder %s18, 0
      %p148 = por %p146, %p147
      %p149 = scmp.ne.s32.totalorder %s141, %s143
      %p150 = scmp.eq.s32.totalorder %s23, 7
      %p151 = por %p149, %p150
      %p152 = scmp.ne.s32.totalorder %s143, %s144
      %p153 = scmp.eq.s32.totalorder %s23, 0
      %p154 = por %p152, %p153
      %p155 = scmp.ne.s32.totalorder %s143, %s144
      %p156 = scmp.eq.s32.totalorder %s24, 7
      %p157 = por %p155, %p156
      %p159 = scmp.ne.s32.totalorder %s144, %s158
      %p160 = scmp.eq.s32.totalorder %s24, 0
      %p161 = por %p159, %p160
      %s163 = sadd.s32 %s162, 1
      %p166 = scmp.eq.s32.totalorder %s18, 7
      %p167 = scmp.ne.s32.totalorder %s162, %s164
      %p168 = scmp.eq.s32.totalorder %s18, 0
      %p169 = por %p167, %p168
      %p170 = scmp.ne.s32.totalorder %s162, %s164
      %p171 = scmp.eq.s32.totalorder %s23, 7
      %p172 = por %p170, %p171
      %p173 = scmp.ne.s32.totalorder %s164, %s165
      %p174 = scmp.eq.s32.totalorder %s23, 0
      %p175 = por %p173, %p174
      %p176 = scmp.ne.s32.totalorder %s164, %s165
      %p177 = scmp.eq.s32.totalorder %s24, 7
      %p178 = por %p176, %p177
      %p180 = scmp.ne.s32.totalorder %s165, %s179
      %p181 = scmp.eq.s32.totalorder %s24, 0
      %p182 = por %p180, %p181
      %s184 = sadd.s32 %s183, 1
      %p187 = scmp.eq.s32.totalorder %s18, 7
      %p188 = scmp.ne.s32.totalorder %s183, %s185
      %p189 = scmp.eq.s32.totalorder %s18, 0
      %p190 = por %p188, %p189
      %p191 = scmp.ne.s32.totalorder %s183, %s185
      %p192 = scmp.eq.s32.totalorder %s23, 7
      %p193 = por %p191, %p192
      %p194 = scmp.ne.s32.totalorder %s185, %s186
      %p195 = scmp.eq.s32.totalorder %s23, 0
      %p196 = por %p194, %p195
      %p197 = scmp.ne.s32.totalorder %s185, %s186
      %p198 = scmp.eq.s32.totalorder %s24, 7
      %p199 = por %p197, %p198
      %p201 = scmp.ne.s32.totalorder %s186, %s200
      %p202 = scmp.eq.s32.totalorder %s24, 0
      %p203 = por %p201, %p202
      %s205 = sadd.s32 %s204, 1
      %p208 = scmp.eq.s32.totalorder %s18, 7
      %p209 = scmp.ne.s32.totalorder %s204, %s206
      %p210 = scmp.eq.s32.totalorder %s18, 0
      %p211 = por %p209, %p210
      %p212 = scmp.ne.s32.totalorder %s204, %s206
      %p213 = scmp.eq.s32.totalorder %s23, 7
      %p214 = por %p212, %p213
      %p215 = scmp.ne.s32.totalorder %s206, %s207
      %p216 = scmp.eq.s32.totalorder %s23, 0
      %p217 = por %p215, %p216
      %p218 = scmp.ne.s32.totalorder %s206, %s207
      %p219 = scmp.eq.s32.totalorder %s24, 7
      %p220 = por %p218, %p219
      %p222 = scmp.ne.s32.totalorder %s207, %s221
      %p223 = scmp.eq.s32.totalorder %s24, 0
      %p224 = por %p222, %p223
      %s225 = ssub.s32 %s18, %s25
      %p226 = scmp.eq.s32.totalorder %s225, 0
      %s228 = sadd.s32 %s227, 1
      %s229 = scalar_select %p226, %s227, %s228
      %p232 = pneg %p226
      %p233 = scmp.eq.s32.totalorder %s18, 7
      %p234 = por %p232, %p233
      %p235 = scmp.ne.s32.totalorder %s227, %s230
      %p236 = scmp.eq.s32.totalorder %s18, 0
      %p237 = por %p235, %p236
      %p238 = scmp.ne.s32.totalorder %s227, %s230
      %p239 = scmp.eq.s32.totalorder %s23, 7
      %p240 = por %p238, %p239
      %p241 = scmp.ne.s32.totalorder %s230, %s231
      %p242 = scmp.eq.s32.totalorder %s23, 0
      %p243 = por %p241, %p242
      %p244 = scmp.ne.s32.totalorder %s230, %s231
      %p245 = scmp.eq.s32.totalorder %s24, 7
      %p246 = por %p244, %p245
      %p248 = scmp.ne.s32.totalorder %s231, %s247
      %p249 = scmp.eq.s32.totalorder %s24, 0
      %p250 = por %p248, %p249
      %p251 = scmp.le.s32.totalorder 1, %s18
      %p252 = scmp.lt.s32.totalorder %s18, 9
      %p253 = pnand %p251, %p252
      %p254 = pneg %p253
      // Predicated region
      $region9: #{decoy_pointwise_attention.1} parent=5 // pred_check
        _
      $region10: #{decoy_pointwise_attention.1} parent=5 // pred_check_branch
        %256 = sbr.rel (%p253) target = $region12
      $region11: #{decoy_pointwise_attention.1} parent=5 // pred_region
        %s257 = ssub.s32 %s18, 1
        // Predicated region
        $region13: #{decoy_pointwise_attention.1} parent=11 // pred_check
          %p258 = pneg %p91
        $region14: #{decoy_pointwise_attention.1} parent=11 // pred_check_branch
          %260 = sbr.rel (%p258) target = $region16
        $region15: #{decoy_pointwise_attention.1} parent=11 // pred_region
          _
        $region16: #{decoy_pointwise_attention.1} parent=11 // pred_fallthru
          _
        // Predicated region
        $region17: #{decoy_pointwise_attention.1} parent=11 // pred_check
          %p261 = pneg %p112
        $region18: #{decoy_pointwise_attention.1} parent=11 // pred_check_branch
          %263 = sbr.rel (%p261) target = $region20
        $region19: #{decoy_pointwise_attention.1} parent=11 // pred_region
          _
        $region20: #{decoy_pointwise_attention.1} parent=11 // pred_fallthru
          _
        // Predicated region
        $region21: #{decoy_pointwise_attention.1} parent=11 // pred_check
          %p264 = pneg %p133
        $region22: #{decoy_pointwise_attention.1} parent=11 // pred_check_branch
          %266 = sbr.rel (%p264) target = $region24
        $region23: #{decoy_pointwise_attention.1} parent=11 // pred_region
          _
        $region24: #{decoy_pointwise_attention.1} parent=11 // pred_fallthru
          _
        // Predicated region
        $region25: #{decoy_pointwise_attention.1} parent=11 // pred_check
          %p267 = pneg %p154
        $region26: #{decoy_pointwise_attention.1} parent=11 // pred_check_branch
          %269 = sbr.rel (%p267) target = $region28
        $region27: #{decoy_pointwise_attention.1} parent=11 // pred_region
          _
        $region28: #{decoy_pointwise_attention.1} parent=11 // pred_fallthru
          _
        // Predicated region
        $region29: #{decoy_pointwise_attention.1} parent=11 // pred_check
          %p270 = pneg %p175
        $region30: #{decoy_pointwise_attention.1} parent=11 // pred_check_branch
          %272 = sbr.rel (%p270) target = $region32
        $region31: #{decoy_pointwise_attention.1} parent=11 // pred_region
          _
        $region32: #{decoy_pointwise_attention.1} parent=11 // pred_fallthru
          _
        // Predicated region
        $region33: #{decoy_pointwise_attention.1} parent=11 // pred_check
          %p273 = pneg %p196
        $region34: #{decoy_pointwise_attention.1} parent=11 // pred_check_branch
          %275 = sbr.rel (%p273) target = $region36
        $region35: #{decoy_pointwise_attention.1} parent=11 // pred_region
          _
        $region36: #{decoy_pointwise_attention.1} parent=11 // pred_fallthru
          _
        // Predicated region
        $region37: #{decoy_pointwise_attention.1} parent=11 // pred_check
          %p276 = pneg %p217
        $region38: #{decoy_pointwise_attention.1} parent=11 // pred_check_branch
          %278 = sbr.rel (%p276) target = $region40
        $region39: #{decoy_pointwise_attention.1} parent=11 // pred_region
          _
        $region40: #{decoy_pointwise_attention.1} parent=11 // pred_fallthru
          _
      $region12: #{decoy_pointwise_attention.1} parent=5 // pred_fallthru
        _
      %p279 = scmp.lt.s32.totalorder %s18, 8
      // Predicated region
      $region41: #{decoy_pointwise_attention.1} parent=5 // pred_check
        %p280 = pneg %p279
      $region42: #{decoy_pointwise_attention.1} parent=5 // pred_check_branch
        %282 = sbr.rel (%p280) target = $region44
      $region43: #{decoy_pointwise_attention.1} parent=5 // pred_region
        // Predicated region
        $region45: #{decoy_pointwise_attention.1} parent=43 // pred_check
          %p283 = pneg %p38
        $region46: #{decoy_pointwise_attention.1} parent=43 // pred_check_branch
          %285 = sbr.rel (%p283) target = $region48
        $region47: #{decoy_pointwise_attention.1} parent=43 // pred_region
          %s286 = smul.u32 2, %s18
          %p287 = scmp.lt.s32.totalorder %s286, 15
          %s288 = scalar_select %p287, %s286, 15
          %s289 = smul.addr %s288, 2
          %s290 = smul.addr %s289, 4
          %s291 = scalar_lea.vmem %s0, %s290
          %s292 = smul.u32 2, %s18
        $region48: #{decoy_pointwise_attention.1} parent=43 // pred_fallthru
          _
        // Predicated region
        $region49: #{decoy_pointwise_attention.1} parent=43 // pred_check
          %p293 = pneg %p64
        $region50: #{decoy_pointwise_attention.1} parent=43 // pred_check_branch
          %295 = sbr.rel (%p293) target = $region52
        $region51: #{decoy_pointwise_attention.1} parent=43 // pred_region
          %s296 = sand.u32 %s54, 1
          %s297 = sand.u32 %s54, 1
          %s298 = smul.addr %s297, 64
          %s299 = scalar_lea.vmem [#allocation2], %s298
          %s300 = smul.u32 2, %s18
          %s301 = smul.addr %s300, 2
          %s302 = smul.addr %s301, 4
          %s303 = scalar_lea.vmem %s1, %s302
          // Predicated region
          $region53: #{decoy_pointwise_attention.1} parent=51 // pred_check
            _
          $region54: #{decoy_pointwise_attention.1} parent=51 // pred_check_branch
            %305 = sbr.rel (0) target = $region56
          $region55: #{decoy_pointwise_attention.1} parent=51 // pred_region
            // Predicated region
            $region57: #{decoy_pointwise_attention.1} parent=55 // pred_check
              _
            $region58: #{decoy_pointwise_attention.1} parent=55 // pred_check_branch
              %307 = sbr.rel target = $region60
            $region59: #{decoy_pointwise_attention.1} parent=55 // pred_region
              // Predicated region
              $region72: #{decoy_pointwise_attention.1} parent=59 // pred_check
                _
              $region73: #{decoy_pointwise_attention.1} parent=59 // pred_check_branch
                %352 = sbr.rel (0) target = $region75
              $region74: #{decoy_pointwise_attention.1} parent=59 // pred_region
                loop: start=0, step=1, limit=1
                $region76: #{decoy_pointwise_attention.1} parent=74 // loop_pre_header
                  _
                $region77: #{decoy_pointwise_attention.1} parent=74 // loop_header
                  %s354 = sphi 0, %s358
                  %p355 = scmp.ge.s32.totalorder %s354, 1
                  %s359 = sphi %s303, %s303
                  %s360 = sphi %s299, %s299
                $region78: #{decoy_pointwise_attention.1} parent=74 // loop_header_branch
                  %357 = sbr.rel (%p355) target = $region82
                $region79: #{decoy_pointwise_attention.1} parent=74 // loop_body
                  _
                $region80: #{decoy_pointwise_attention.1} parent=74 // loop_footer
                  %s358 = sadd.s32 1, %s354
                $region81: #{decoy_pointwise_attention.1} parent=74 // loop_footer_branch
                  %353 = sbr.rel target = $region77
                $region82: #{decoy_pointwise_attention.1} parent=74 // loop_exit
                  _
                loop: start=0, step=1, limit=1
                $region83: #{decoy_pointwise_attention.1} parent=74 // loop_pre_header
                  _
                $region84: #{decoy_pointwise_attention.1} parent=74 // loop_header
                  %s363 = sphi 0, %s367
                  %p364 = scmp.ge.s32.totalorder %s363, 1
                  %s368 = sphi %s303, %s303
                  %s369 = sphi %s299, %s299
                $region85: #{decoy_pointwise_attention.1} parent=74 // loop_header_branch
                  %366 = sbr.rel (%p364) target = $region89
                $region86: #{decoy_pointwise_attention.1} parent=74 // loop_body
                  %v370 = vld [vmem:[%s368] sm:$0xf]
                  %371 = vst [vmem:[%s369] sm:$0xf] %v370
                  %v372 = vld [vmem:[%s368 + $0x4] sm:$0xf]
                  %373 = vst [vmem:[%s369 + $0x4] sm:$0xf] %v372
                  %v374 = vld [vmem:[%s368 + $0x8] sm:$0xf]
                  %375 = vst [vmem:[%s369 + $0x8] sm:$0xf] %v374
                  %v376 = vld [vmem:[%s368 + $0xc] sm:$0xf]
                  %377 = vst [vmem:[%s369 + $0xc] sm:$0xf] %v376
                  %v378 = vld [vmem:[%s368 + $0x80] sm:$0xf]
                  %379 = vst [vmem:[%s369 + $0x10] sm:$0xf] %v378
                  %v380 = vld [vmem:[%s368 + $0x84] sm:$0xf]
                  %381 = vst [vmem:[%s369 + $0x14] sm:$0xf] %v380
                  %v382 = vld [vmem:[%s368 + $0x88] sm:$0xf]
                  %383 = vst [vmem:[%s369 + $0x18] sm:$0xf] %v382
                  %v384 = vld [vmem:[%s368 + $0x8c] sm:$0xf]
                  %385 = vst [vmem:[%s369 + $0x1c] sm:$0xf] %v384
                  %v386 = vld [vmem:[%s368 + $0x100] sm:$0xf]
                  %387 = vst [vmem:[%s369 + $0x20] sm:$0xf] %v386
                  %v388 = vld [vmem:[%s368 + $0x104] sm:$0xf]
                  %389 = vst [vmem:[%s369 + $0x24] sm:$0xf] %v388
                  %v390 = vld [vmem:[%s368 + $0x108] sm:$0xf]
                  %391 = vst [vmem:[%s369 + $0x28] sm:$0xf] %v390
                  %v392 = vld [vmem:[%s368 + $0x10c] sm:$0xf]
                  %393 = vst [vmem:[%s369 + $0x2c] sm:$0xf] %v392
                  %v394 = vld [vmem:[%s368 + $0x180] sm:$0xf]
                  %395 = vst [vmem:[%s369 + $0x30] sm:$0xf] %v394
                  %v396 = vld [vmem:[%s368 + $0x184] sm:$0xf]
                  %397 = vst [vmem:[%s369 + $0x34] sm:$0xf] %v396
                  %v398 = vld [vmem:[%s368 + $0x188] sm:$0xf]
                  %399 = vst [vmem:[%s369 + $0x38] sm:$0xf] %v398
                  %v400 = vld [vmem:[%s368 + $0x18c] sm:$0xf]
                  %401 = vst [vmem:[%s369 + $0x3c] sm:$0xf] %v400
                $region87: #{decoy_pointwise_attention.1} parent=74 // loop_footer
                  %s367 = sadd.s32 1, %s363
                $region88: #{decoy_pointwise_attention.1} parent=74 // loop_footer_branch
                  %362 = sbr.rel target = $region84
                $region89: #{decoy_pointwise_attention.1} parent=74 // loop_exit
                  _
              $region75: #{decoy_pointwise_attention.1} parent=59 // pred_fallthru
                _
            $region60: #{decoy_pointwise_attention.1} parent=55 // pred_fallthru
              _
            // Predicated region
            $region61: #{decoy_pointwise_attention.1} parent=55 // pred_check
              _
            $region62: #{decoy_pointwise_attention.1} parent=55 // pred_check_branch
              %309 = sbr.rel (0) target = $region64
            $region63: #{decoy_pointwise_attention.1} parent=55 // pred_region
              loop: start=0, step=1, limit=1
              $region65: #{decoy_pointwise_attention.1} parent=63 // loop_pre_header
                _
              $region66: #{decoy_pointwise_attention.1} parent=63 // loop_header
                %s312 = sphi 0, %s316
                %p313 = scmp.ge.s32.totalorder %s312, 1
                %s317 = sphi %s303, %s303
                %s318 = sphi %s299, %s299
              $region67: #{decoy_pointwise_attention.1} parent=63 // loop_header_branch
                %315 = sbr.rel (%p313) target = $region71
              $region68: #{decoy_pointwise_attention.1} parent=63 // loop_body
                %v319 = vld [vmem:[%s317] sm:$0xf]
                %320 = vst [vmem:[%s318] sm:$0xf] %v319
                %v321 = vld [vmem:[%s317 + $0x4] sm:$0xf]
                %322 = vst [vmem:[%s318 + $0x4] sm:$0xf] %v321
                %v323 = vld [vmem:[%s317 + $0x8] sm:$0xf]
                %324 = vst [vmem:[%s318 + $0x8] sm:$0xf] %v323
                %v325 = vld [vmem:[%s317 + $0xc] sm:$0xf]
                %326 = vst [vmem:[%s318 + $0xc] sm:$0xf] %v325
                %v327 = vld [vmem:[%s317 + $0x80] sm:$0xf]
                %328 = vst [vmem:[%s318 + $0x10] sm:$0xf] %v327
                %v329 = vld [vmem:[%s317 + $0x84] sm:$0xf]
                %330 = vst [vmem:[%s318 + $0x14] sm:$0xf] %v329
                %v331 = vld [vmem:[%s317 + $0x88] sm:$0xf]
                %332 = vst [vmem:[%s318 + $0x18] sm:$0xf] %v331
                %v333 = vld [vmem:[%s317 + $0x8c] sm:$0xf]
                %334 = vst [vmem:[%s318 + $0x1c] sm:$0xf] %v333
                %v335 = vld [vmem:[%s317 + $0x100] sm:$0xf]
                %336 = vst [vmem:[%s318 + $0x20] sm:$0xf] %v335
                %v337 = vld [vmem:[%s317 + $0x104] sm:$0xf]
                %338 = vst [vmem:[%s318 + $0x24] sm:$0xf] %v337
                %v339 = vld [vmem:[%s317 + $0x108] sm:$0xf]
                %340 = vst [vmem:[%s318 + $0x28] sm:$0xf] %v339
                %v341 = vld [vmem:[%s317 + $0x10c] sm:$0xf]
                %342 = vst [vmem:[%s318 + $0x2c] sm:$0xf] %v341
                %v343 = vld [vmem:[%s317 + $0x180] sm:$0xf]
                %344 = vst [vmem:[%s318 + $0x30] sm:$0xf] %v343
                %v345 = vld [vmem:[%s317 + $0x184] sm:$0xf]
                %346 = vst [vmem:[%s318 + $0x34] sm:$0xf] %v345
                %v347 = vld [vmem:[%s317 + $0x188] sm:$0xf]
                %348 = vst [vmem:[%s318 + $0x38] sm:$0xf] %v347
                %v349 = vld [vmem:[%s317 + $0x18c] sm:$0xf]
                %350 = vst [vmem:[%s318 + $0x3c] sm:$0xf] %v349
              $region69: #{decoy_pointwise_attention.1} parent=63 // loop_footer
                %s316 = sadd.s32 1, %s312
              $region70: #{decoy_pointwise_attention.1} parent=63 // loop_footer_branch
                %311 = sbr.rel target = $region66
              $region71: #{decoy_pointwise_attention.1} parent=63 // loop_exit
                _
            $region64: #{decoy_pointwise_attention.1} parent=55 // pred_fallthru
              _
          $region56: #{decoy_pointwise_attention.1} parent=51 // pred_fallthru
            _
          %402 = vnop
        $region52: #{decoy_pointwise_attention.1} parent=43 // pred_fallthru
          _
      $region44: #{decoy_pointwise_attention.1} parent=5 // pred_fallthru
        _
      %p403 = scmp.le.s32.totalorder 1, %s18
      %p404 = scmp.lt.s32.totalorder %s18, 9
      %p405 = pnand %p403, %p404
      %p406 = pneg %p405
      // Predicated region
      $region90: #{decoy_pointwise_attention.1} parent=5 // pred_check
        _
      $region91: #{decoy_pointwise_attention.1} parent=5 // pred_check_branch
        %408 = sbr.rel (%p405) target = $region93
      $region92: #{decoy_pointwise_attention.1} parent=5 // pred_region
        %s409 = ssub.s32 %s18, 1
        %s410 = sand.u32 %s57, 1
        %s411 = sand.u32 %s57, 1
        %s412 = smul.addr %s411, 64
        %s413 = scalar_lea.vmem [#allocation2], %s412
        // Predicated region
        $region94: #{decoy_pointwise_attention.1} parent=92 // pred_check
          %p414 = pneg %p70
        $region95: #{decoy_pointwise_attention.1} parent=92 // pred_check_branch
          %416 = sbr.rel (%p414) target = $region97
        $region96: #{decoy_pointwise_attention.1} parent=92 // pred_region
          _
        $region97: #{decoy_pointwise_attention.1} parent=92 // pred_fallthru
          _
        %s417 = smul.u32 2, %s23
        %p418 = scmp.lt.s32.totalorder %s417, 15
        %s419 = scalar_select %p418, %s417, 15
        %s420 = smul.addr %s419, 2
        %s421 = smul.addr %s420, 4
        %s422 = scalar_lea.vmem %s0, %s421
        %p423 = pneg %p44
        %p424 = pneg %p41
        %s425 = sand.u32 %s57, 1
        %s426 = sand.u32 %s57, 1
        %s427 = smul.addr %s426, 64
        %s428 = scalar_lea.vmem [#allocation2], %s427
        %p429 = pneg %p70
        %p430 = pneg %p67
        %p431 = pneg %p91
        %p432 = pneg %p88
        %p433 = pneg %p112
        %p434 = pneg %p109
        %p435 = pneg %p133
        %p436 = pneg %p130
        %p437 = pneg %p154
        %p438 = pneg %p151
        %p439 = pneg %p175
        %p440 = pneg %p172
        %p441 = pneg %p196
        %p442 = pneg %p193
        %p443 = pneg %p217
        %p444 = pneg %p214
        %p445 = pneg %p243
        %p446 = pneg %p240
        %s447 = sand.u32 %s230, 1
        %s448 = scalar_lea.sflag [#allocation4], %s447
        %s449 = sand.u32 %s230, 1
        %s450 = smul.addr %s449, 32
        %s451 = scalar_lea.vmem [#allocation3], %s450
        %s452 = smul.u32 2, %s23
        %p453 = scmp.lt.s32.totalorder %s452, 15
        %s454 = scalar_select %p453, %s452, 15
        %s455 = smul.addr %s454, 2
        %s456 = smul.addr %s455, 4
        %s457 = scalar_lea.vmem %s0, %s456
        %s458 = smul.u32 2, %s23
        %s459 = smul.u32 2, %s23
        %s460 = smul.u32 2, %s23
        %v462 = vld [vmem:[%s457] sm:$0xf]
        %v463 = vld [vmem:[%s457 + $0x4] sm:$0xf]
        %v464 = vld [vmem:[%s457 + $0x8] sm:$0xf]
        %v465 = vld [vmem:[%s457 + $0xc] sm:$0xf]
        %v466 = vld [vmem:[%s413] sm:$0xf]
        %v467 = vld [vmem:[%s413 + $0x4] sm:$0xf]
        %v468 = vld [vmem:[%s413 + $0x8] sm:$0xf]
        %v469 = vld [vmem:[%s413 + $0xc] sm:$0xf]
        %v470 = vld [vmem:[%s413 + $0x10] sm:$0xf]
        %v471 = vld [vmem:[%s413 + $0x14] sm:$0xf]
        %v472 = vld [vmem:[%s413 + $0x18] sm:$0xf]
        %v473 = vld [vmem:[%s413 + $0x1c] sm:$0xf]
        %v474 = vld [vmem:[%s413 + $0x20] sm:$0xf]
        %v475 = vld [vmem:[%s413 + $0x24] sm:$0xf]
        %v476 = vld [vmem:[%s413 + $0x28] sm:$0xf]
        %v477 = vld [vmem:[%s413 + $0x2c] sm:$0xf]
        %v478 = vld [vmem:[%s413 + $0x30] sm:$0xf]
        %v479 = vld [vmem:[%s413 + $0x34] sm:$0xf]
        %v480 = vld [vmem:[%s413 + $0x38] sm:$0xf]
        %v481 = vld [vmem:[%s413 + $0x3c] sm:$0xf]
        %v482 = vld [vmem:[%s3] sm:$0xf]
        %v483 = vld [vmem:[%s3 + $0x4] sm:$0xf]
        %v484 = vld [vmem:[%s3 + $0x8] sm:$0xf]
        %v485 = vld [vmem:[%s3 + $0xc] sm:$0xf]
        %v490 = vunpack.c.l.b16 %v462
        %v491 = vunpack.c.l.b16 %v463
        %v492 = vunpack.c.l.b16 %v464
        %v493 = vunpack.c.l.b16 %v465
        %v494 = vpack.c.b16 %v491, %v490
        %v495 = vpack.c.b16 %v493, %v492
        %v500 = vunpack.c.l.b16 %v482
        %v501 = vunpack.c.l.b16 %v483
        %v502 = vunpack.c.l.b16 %v484
        %v503 = vunpack.c.l.b16 %v485
        %v504 = vpack.c.b16 %v501, %v500
        %v505 = vpack.c.b16 %v503, %v502
        %vm508 = vcmask 261120
        %v510 = vsel %vm508, %v494, 0
        %v513 = vsel %vm508, %v495, 0
        %515 = vmatprep.subr.bf16.mxu0 0
        %516 = vmatpush1.bf16.msra.mxu0 %v504
        %517 = vmatprep.subr.bf16.mxu0 0
        %518 = vmatpush1.bf16.msra.mxu0 %v505
        %519 = vmatprep.subr.bf16.mxu0 0
        %520 = vmatpush1.bf16.msra.mxu0 0
        %521 = vmatprep.subr.bf16.mxu0 0
        %522 = vmatpush1.bf16.msra.mxu0 0
        %523 = vmatprep.subr.bf16.mxu0 0
        %524 = vmatpush1.bf16.msra.mxu0 0
        %525 = vmatprep.subr.bf16.mxu0 0
        %526 = vmatpush1.bf16.msra.mxu0 0
        %527 = vmatprep.subr.bf16.mxu0 0
        %528 = vmatpush1.bf16.msra.mxu0 0
        %529 = vmatprep.subr.bf16.mxu0 0
        %530 = vmatpush1.bf16.msra.mxu0 0
        %531 = vmatprep.subr.bf16.mxu0 0
        %532 = vmatpush1.bf16.msra.mxu0 0
        %533 = vmatprep.subr.bf16.mxu0 0
        %534 = vmatpush1.bf16.msra.mxu0 0
        %535 = vmatprep.subr.bf16.mxu0 0
        %536 = vmatpush1.bf16.msra.mxu0 0
        %537 = vmatprep.subr.bf16.mxu0 0
        %538 = vmatpush1.bf16.msra.mxu0 0
        %539 = vmatprep.subr.bf16.mxu0 0
        %540 = vmatpush1.bf16.msra.mxu0 0
        %541 = vmatprep.subr.bf16.mxu0 0
        %542 = vmatpush1.bf16.msra.mxu0 0
        %543 = vmatprep.subr.bf16.mxu0 0
        %544 = vmatpush1.bf16.msra.mxu0 0
        %545 = vmatprep.subr.bf16.mxu0 0
        %546 = vmatpush1.bf16.msra.mxu0 0
        %547 = vmatprep.mubr.bf16.mxu0 0
        %548 = vmatmul.mubr.bf16.gmra.mrb[0].mxu0 %v510
        %v549 = vpop.f32.mrb[0].mxu0
        %v550 = vadd.f32 0.0, %v549
        %v551 = vpop.f32.mrb[0].mxu0
        %v552 = vpop.f32.mrb[0].mxu0
        %v553 = vadd.f32 0.0, %v552
        %v554 = vpop.f32.mrb[0].mxu0
        %555 = vmatprep.mubr.bf16.mxu0 0
        %556 = vmatmul.mubr.bf16.gmra.mrb[0].mxu0 %v513
        %v557 = vpop.f32.mrb[0].mxu0
        %v558 = vadd.f32 0.0, %v557
        %v559 = vpop.f32.mrb[0].mxu0
        %v560 = vpop.f32.mrb[0].mxu0
        %v561 = vadd.f32 0.0, %v560
        %v562 = vpop.f32.mrb[0].mxu0
        %563 = vdwg.mxu0
        %v564 = vld [vmem:[%s4] sm:$0xf]
        %v565 = vld [vmem:[%s4 + $0x4] sm:$0xf]
        %v582 = vunpack.c.l.b16 %v466
        %v583 = vunpack.c.l.b16 %v467
        %v584 = vunpack.c.l.b16 %v468
        %v585 = vunpack.c.l.b16 %v469
        %v586 = vunpack.c.l.b16 %v470
        %v587 = vunpack.c.l.b16 %v471
        %v588 = vunpack.c.l.b16 %v472
        %v589 = vunpack.c.l.b16 %v473
        %v590 = vunpack.c.l.b16 %v474
        %v591 = vunpack.c.l.b16 %v475
        %v592 = vunpack.c.l.b16 %v476
        %v593 = vunpack.c.l.b16 %v477
        %v594 = vunpack.c.l.b16 %v478
        %v595 = vunpack.c.l.b16 %v479
        %v596 = vunpack.c.l.b16 %v480
        %v597 = vunpack.c.l.b16 %v481
        %v598 = vpack.c.b16 %v583, %v582
        %v599 = vpack.c.b16 %v585, %v584
        %v600 = vpack.c.b16 %v587, %v586
        %v601 = vpack.c.b16 %v589, %v588
        %v602 = vpack.c.b16 %v591, %v590
        %v603 = vpack.c.b16 %v593, %v592
        %v604 = vpack.c.b16 %v595, %v594
        %v605 = vpack.c.b16 %v597, %v596
        %v608 = vunpack.c.l.b16 %v564
        %v609 = vunpack.c.l.b16 %v565
        %v610 = vpack.c.b16 %v609, %v608
        %vm612 = vcmask 130048
        %v614 = vsel %vm612, %v598, 0
        %v617 = vsel %vm612, %v599, 0
        %v620 = vsel %vm612, %v600, 0
        %v623 = vsel %vm612, %v601, 0
        %v626 = vsel %vm612, %v602, 0
        %v629 = vsel %vm612, %v603, 0
        %v632 = vsel %vm612, %v604, 0
        %v635 = vsel %vm612, %v605, 0
        %637 = vmatprep.subr.bf16.mxu0 0
        %638 = vmatpush1.bf16.msra.mxu0 %v610
        %639 = vmatprep.subr.bf16.mxu0 0
        %640 = vmatpush1.bf16.msra.mxu0 0
        %641 = vmatprep.subr.bf16.mxu0 0
        %642 = vmatpush1.bf16.msra.mxu0 0
        %643 = vmatprep.subr.bf16.mxu0 0
        %644 = vmatpush1.bf16.msra.mxu0 0
        %645 = vmatprep.subr.bf16.mxu0 0
        %646 = vmatpush1.bf16.msra.mxu0 0
        %647 = vmatprep.subr.bf16.mxu0 0
        %648 = vmatpush1.bf16.msra.mxu0 0
        %649 = vmatprep.subr.bf16.mxu0 0
        %650 = vmatpush1.bf16.msra.mxu0 0
        %651 = vmatprep.subr.bf16.mxu0 0
        %652 = vmatpush1.bf16.msra.mxu0 0
        %653 = vmatprep.subr.bf16.mxu0 0
        %654 = vmatpush1.bf16.msra.mxu0 0
        %655 = vmatprep.subr.bf16.mxu0 0
        %656 = vmatpush1.bf16.msra.mxu0 0
        %657 = vmatprep.subr.bf16.mxu0 0
        %658 = vmatpush1.bf16.msra.mxu0 0
        %659 = vmatprep.subr.bf16.mxu0 0
        %660 = vmatpush1.bf16.msra.mxu0 0
        %661 = vmatprep.subr.bf16.mxu0 0
        %662 = vmatpush1.bf16.msra.mxu0 0
        %663 = vmatprep.subr.bf16.mxu0 0
        %664 = vmatpush1.bf16.msra.mxu0 0
        %665 = vmatprep.subr.bf16.mxu0 0
        %666 = vmatpush1.bf16.msra.mxu0 0
        %667 = vmatprep.subr.bf16.mxu0 0
        %668 = vmatpush1.bf16.msra.mxu0 0
        %669 = vmatprep.mubr.bf16.mxu0 0
        %670 = vmatmul.mubr.bf16.gmra.mrb[0].mxu0 %v614
        %v671 = vpop.f32.mrb[0].mxu0
        %v672 = vadd.f32 0.0, %v671
        %v673 = vpop.f32.mrb[0].mxu0
        %v674 = vpop.f32.mrb[0].mxu0
        %v675 = vadd.f32 0.0, %v674
        %v676 = vpop.f32.mrb[0].mxu0
        %677 = vmatprep.mubr.bf16.mxu0 0
        %678 = vmatmul.mubr.bf16.gmra.mrb[0].mxu0 %v617
        %v679 = vpop.f32.mrb[0].mxu0
        %v680 = vadd.f32 0.0, %v679
        %v681 = vpop.f32.mrb[0].mxu0
        %v682 = vpop.f32.mrb[0].mxu0
        %v683 = vadd.f32 0.0, %v682
        %v684 = vpop.f32.mrb[0].mxu0
        %685 = vmatprep.mubr.bf16.mxu0 0
        %686 = vmatmul.mubr.bf16.gmra.mrb[0].mxu0 %v620
        %v687 = vpop.f32.mrb[0].mxu0
        %v688 = vadd.f32 0.0, %v687
        %v689 = vpop.f32.mrb[0].mxu0
        %v690 = vpop.f32.mrb[0].mxu0
        %v691 = vadd.f32 0.0, %v690
        %v692 = vpop.f32.mrb[0].mxu0
        %693 = vmatprep.mubr.bf16.mxu0 0
        %694 = vmatmul.mubr.bf16.gmra.mrb[0].mxu0 %v623
        %v695 = vpop.f32.mrb[0].mxu0
        %v696 = vadd.f32 0.0, %v695
        %v697 = vpop.f32.mrb[0].mxu0
        %v698 = vpop.f32.mrb[0].mxu0
        %v699 = vadd.f32 0.0, %v698
        %v700 = vpop.f32.mrb[0].mxu0
        %701 = vmatprep.mubr.bf16.mxu0 0
        %702 = vmatmul.mubr.bf16.gmra.mrb[0].mxu0 %v626
        %v703 = vpop.f32.mrb[0].mxu0
        %v704 = vadd.f32 0.0, %v703
        %v705 = vpop.f32.mrb[0].mxu0
        %v706 = vpop.f32.mrb[0].mxu0
        %v707 = vadd.f32 0.0, %v706
        %v708 = vpop.f32.mrb[0].mxu0
        %709 = vmatprep.mubr.bf16.mxu0 0
        %710 = vmatmul.mubr.bf16.gmra.mrb[0].mxu0 %v629
        %v711 = vpop.f32.mrb[0].mxu0
        %v712 = vadd.f32 0.0, %v711
        %v713 = vpop.f32.mrb[0].mxu0
        %v714 = vpop.f32.mrb[0].mxu0
        %v715 = vadd.f32 0.0, %v714
        %v716 = vpop.f32.mrb[0].mxu0
        %717 = vmatprep.mubr.bf16.mxu0 0
        %718 = vmatmul.mubr.bf16.gmra.mrb[0].mxu0 %v632
        %v719 = vpop.f32.mrb[0].mxu0
        %v720 = vadd.f32 0.0, %v719
        %v721 = vpop.f32.mrb[0].mxu0
        %v722 = vpop.f32.mrb[0].mxu0
        %v723 = vadd.f32 0.0, %v722
        %v724 = vpop.f32.mrb[0].mxu0
        %725 = vmatprep.mubr.bf16.mxu0 0
        %726 = vmatmul.mubr.bf16.gmra.mrb[0].mxu0 %v635
        %v727 = vpop.f32.mrb[0].mxu0
        %v728 = vadd.f32 0.0, %v727
        %v729 = vpop.f32.mrb[0].mxu0
        %v730 = vpop.f32.mrb[0].mxu0
        %v731 = vadd.f32 0.0, %v730
        %v732 = vpop.f32.mrb[0].mxu0
        %733 = vdwg.mxu0
        %v734 = vmul.f32 %v672, %v550
        %v735 = vmul.f32 %v675, %v553
        %v736 = vmul.f32 %v680, %v558
        %v737 = vmul.f32 %v683, %v561
        %v738 = vmul.f32 %v688, %v550
        %v739 = vmul.f32 %v691, %v553
        %v740 = vmul.f32 %v696, %v558
        %v741 = vmul.f32 %v699, %v561
        %v742 = vmul.f32 %v704, %v550
        %v743 = vmul.f32 %v707, %v553
        %v744 = vmul.f32 %v712, %v558
        %v745 = vmul.f32 %v715, %v561
        %v746 = vmul.f32 %v720, %v550
        %v747 = vmul.f32 %v723, %v553
        %v748 = vmul.f32 %v728, %v558
        %v749 = vmul.f32 %v731, %v561
        %v750 = vpack.c.bf16 %v735, %v734
        %v751 = vpack.c.bf16 %v737, %v736
        %v752 = vpack.c.bf16 %v739, %v738
        %v753 = vpack.c.bf16 %v741, %v740
        %v754 = vpack.c.bf16 %v743, %v742
        %v755 = vpack.c.bf16 %v745, %v744
        %v756 = vpack.c.bf16 %v747, %v746
        %v757 = vpack.c.bf16 %v749, %v748
        %v758 = vld [vmem:[%s7] sm:$0xf]
        %v759 = vld [vmem:[%s7 + $0x4] sm:$0xf]
        %v760 = vld [vmem:[%s7 + $0x8] sm:$0xf]
        %v761 = vld [vmem:[%s7 + $0xc] sm:$0xf]
        %v762 = vld [vmem:[%s7 + $0x10] sm:$0xf]
        %v763 = vld [vmem:[%s7 + $0x14] sm:$0xf]
        %v764 = vld [vmem:[%s7 + $0x18] sm:$0xf]
        %v765 = vld [vmem:[%s7 + $0x1c] sm:$0xf]
        %v774 = vunpack.c.l.b16 %v758
        %v775 = vunpack.c.l.b16 %v759
        %v776 = vunpack.c.l.b16 %v760
        %v777 = vunpack.c.l.b16 %v761
        %v778 = vunpack.c.l.b16 %v762
        %v779 = vunpack.c.l.b16 %v763
        %v780 = vunpack.c.l.b16 %v764
        %v781 = vunpack.c.l.b16 %v765
        %v782 = vpack.c.b16 %v775, %v774
        %v783 = vpack.c.b16 %v777, %v776
        %v784 = vpack.c.b16 %v779, %v778
        %v785 = vpack.c.b16 %v781, %v780
        %vm790 = vcmask 523264
        %v792 = vsel %vm790, %v750, 0
        %v795 = vsel %vm790, %v751, 0
        %v798 = vsel %vm790, %v752, 0
        %v801 = vsel %vm790, %v753, 0
        %v804 = vsel %vm790, %v754, 0
        %v807 = vsel %vm790, %v755, 0
        %v810 = vsel %vm790, %v756, 0
        %v813 = vsel %vm790, %v757, 0
        %815 = vmatprep.subr.bf16.mxu0 0
        %816 = vmatpush1.bf16.msra.mxu0 %v782
        %817 = vmatprep.subr.bf16.mxu0 0
        %818 = vmatpush1.bf16.msra.mxu0 %v783
        %819 = vmatprep.subr.bf16.mxu0 0
        %820 = vmatpush1.bf16.msra.mxu0 %v784
        %821 = vmatprep.subr.bf16.mxu0 0
        %822 = vmatpush1.bf16.msra.mxu0 %v785
        %823 = vmatprep.subr.bf16.mxu0 0
        %824 = vmatpush1.bf16.msra.mxu0 0
        %825 = vmatprep.subr.bf16.mxu0 0
        %826 = vmatpush1.bf16.msra.mxu0 0
        %827 = vmatprep.subr.bf16.mxu0 0
        %828 = vmatpush1.bf16.msra.mxu0 0
        %829 = vmatprep.subr.bf16.mxu0 0
        %830 = vmatpush1.bf16.msra.mxu0 0
        %831 = vmatprep.subr.bf16.mxu0 0
        %832 = vmatpush1.bf16.msra.mxu0 0
        %833 = vmatprep.subr.bf16.mxu0 0
        %834 = vmatpush1.bf16.msra.mxu0 0
        %835 = vmatprep.subr.bf16.mxu0 0
        %836 = vmatpush1.bf16.msra.mxu0 0
        %837 = vmatprep.subr.bf16.mxu0 0
        %838 = vmatpush1.bf16.msra.mxu0 0
        %839 = vmatprep.subr.bf16.mxu0 0
        %840 = vmatpush1.bf16.msra.mxu0 0
        %841 = vmatprep.subr.bf16.mxu0 0
        %842 = vmatpush1.bf16.msra.mxu0 0
        %843 = vmatprep.subr.bf16.mxu0 0
        %844 = vmatpush1.bf16.msra.mxu0 0
        %845 = vmatprep.subr.bf16.mxu0 0
        %846 = vmatpush1.bf16.msra.mxu0 0
        %847 = vmatprep.mubr.bf16.mxu0 0
        %848 = vmatmul.mubr.bf16.gmra.mrb[0].mxu0 %v792
        %v849 = vpop.f32.mrb[0].mxu0
        %v850 = vadd.f32 0.0, %v849
        %v851 = vpop.f32.mrb[0].mxu0
        %v852 = vpop.f32.mrb[0].mxu0
        %v853 = vadd.f32 0.0, %v852
        %v854 = vpop.f32.mrb[0].mxu0
        %855 = vmatprep.mubr.bf16.mxu0 0
        %856 = vmatmul.mubr.bf16.gmra.mrb[0].mxu0 %v795
        %v857 = vpop.f32.mrb[0].mxu0
        %v858 = vadd.f32 0.0, %v857
        %v859 = vpop.f32.mrb[0].mxu0
        %v860 = vpop.f32.mrb[0].mxu0
        %v861 = vadd.f32 0.0, %v860
        %v862 = vpop.f32.mrb[0].mxu0
        %863 = vmatprep.mubr.bf16.mxu0 0
        %864 = vmatmul.mubr.bf16.gmra.mrb[0].mxu0 %v798
        %v865 = vpop.f32.mrb[0].mxu0
        %v866 = vadd.f32 0.0, %v865
        %v867 = vpop.f32.mrb[0].mxu0
        %v868 = vpop.f32.mrb[0].mxu0
        %v869 = vadd.f32 0.0, %v868
        %v870 = vpop.f32.mrb[0].mxu0
        %871 = vmatprep.mubr.bf16.mxu0 0
        %872 = vmatmul.mubr.bf16.gmra.mrb[0].mxu0 %v801
        %v873 = vpop.f32.mrb[0].mxu0
        %v874 = vadd.f32 0.0, %v873
        %v875 = vpop.f32.mrb[0].mxu0
        %v876 = vpop.f32.mrb[0].mxu0
        %v877 = vadd.f32 0.0, %v876
        %v878 = vpop.f32.mrb[0].mxu0
        %879 = vmatprep.mubr.bf16.mxu0 0
        %880 = vmatmul.mubr.bf16.gmra.mrb[0].mxu0 %v804
        %v881 = vpop.f32.mrb[0].mxu0
        %v882 = vadd.f32 0.0, %v881
        %v883 = vpop.f32.mrb[0].mxu0
        %v884 = vpop.f32.mrb[0].mxu0
        %v885 = vadd.f32 0.0, %v884
        %v886 = vpop.f32.mrb[0].mxu0
        %887 = vmatprep.mubr.bf16.mxu0 0
        %888 = vmatmul.mubr.bf16.gmra.mrb[0].mxu0 %v807
        %v889 = vpop.f32.mrb[0].mxu0
        %v890 = vadd.f32 0.0, %v889
        %v891 = vpop.f32.mrb[0].mxu0
        %v892 = vpop.f32.mrb[0].mxu0
        %v893 = vadd.f32 0.0, %v892
        %v894 = vpop.f32.mrb[0].mxu0
        %895 = vmatprep.mubr.bf16.mxu0 0
        %896 = vmatmul.mubr.bf16.gmra.mrb[0].mxu0 %v810
        %v897 = vpop.f32.mrb[0].mxu0
        %v898 = vadd.f32 0.0, %v897
        %v899 = vpop.f32.mrb[0].mxu0
        %v900 = vpop.f32.mrb[0].mxu0
        %v901 = vadd.f32 0.0, %v900
        %v902 = vpop.f32.mrb[0].mxu0
        %903 = vmatprep.mubr.bf16.mxu0 0
        %904 = vmatmul.mubr.bf16.gmra.mrb[0].mxu0 %v813
        %v905 = vpop.f32.mrb[0].mxu0
        %v906 = vadd.f32 0.0, %v905
        %v907 = vpop.f32.mrb[0].mxu0
        %v908 = vpop.f32.mrb[0].mxu0
        %v909 = vadd.f32 0.0, %v908
        %v910 = vpop.f32.mrb[0].mxu0
        %911 = vdwg.mxu0
        %v912 = vld [vmem:[%s2] sm:$0x1]
        %v913 = vld [vmem:[%s2 + $0x1] sm:$0x1]
        %v914 = vld [vmem:[%s2 + $0x2] sm:$0x1]
        %v915 = vld [vmem:[%s2 + $0x3] sm:$0x1]
        %v920 = vlaneseq
        %v921 = vshrl.u32 %v920, 7
        %v922 = vsub.s32 0, %v921
        %v923 = vrot.slane %v912, %v922
        %v924 = vlaneseq
        %v925 = vshrl.u32 %v924, 7
        %v926 = vsub.s32 0, %v925
        %v927 = vrot.slane %v913, %v926
        %v928 = vlaneseq
        %v929 = vshrl.u32 %v928, 7
        %v930 = vsub.s32 0, %v929
        %v931 = vrot.slane %v914, %v930
        %v932 = vlaneseq
        %v933 = vshrl.u32 %v932, 7
        %v934 = vsub.s32 0, %v933
        %v935 = vrot.slane %v915, %v934
        %v940 = vadd.f32 %v850, %v923
        %v941 = vadd.f32 %v853, %v923
        %v942 = vadd.f32 %v858, %v923
        %v943 = vadd.f32 %v861, %v923
        %v944 = vadd.f32 %v866, %v927
        %v945 = vadd.f32 %v869, %v927
        %v946 = vadd.f32 %v874, %v927
        %v947 = vadd.f32 %v877, %v927
        %v948 = vadd.f32 %v882, %v931
        %v949 = vadd.f32 %v885, %v931
        %v950 = vadd.f32 %v890, %v931
        %v951 = vadd.f32 %v893, %v931
        %v952 = vadd.f32 %v898, %v935
        %v953 = vadd.f32 %v901, %v935
        %v954 = vadd.f32 %v906, %v935
        %v955 = vadd.f32 %v909, %v935
        %v956 = vmax.f32 %v940, %v944
        %v957 = vmax.f32 %v941, %v945
        %v958 = vmax.f32 %v942, %v946
        %v959 = vmax.f32 %v943, %v947
        %v960 = vmax.f32 %v956, %v948
        %v961 = vmax.f32 %v957, %v949
        %v962 = vmax.f32 %v958, %v950
        %v963 = vmax.f32 %v959, %v951
        %v964 = vmax.f32 %v960, %v952
        %v965 = vmax.f32 %v961, %v953
        %v966 = vmax.f32 %v962, %v954
        %v967 = vmax.f32 %v963, %v955
        %v968 = vsub.f32 %v940, %v964
        %v969 = vsub.f32 %v941, %v965
        %v970 = vsub.f32 %v942, %v966
        %v971 = vsub.f32 %v943, %v967
        %v972 = vsub.f32 %v944, %v964
        %v973 = vsub.f32 %v945, %v965
        %v974 = vsub.f32 %v946, %v966
        %v975 = vsub.f32 %v947, %v967
        %v976 = vsub.f32 %v948, %v964
        %v977 = vsub.f32 %v949, %v965
        %v978 = vsub.f32 %v950, %v966
        %v979 = vsub.f32 %v951, %v967
        %v980 = vsub.f32 %v952, %v964
        %v981 = vsub.f32 %v953, %v965
        %v982 = vsub.f32 %v954, %v966
        %v983 = vsub.f32 %v955, %v967
        %v984 = vmul.f32 %v968, 1.442695
        %v985 = vpow.pop %v984
        %v986 = vmul.f32 %v969, 1.442695
        %v987 = vpow.pop %v986
        %v988 = vmul.f32 %v970, 1.442695
        %v989 = vpow.pop %v988
        %v990 = vmul.f32 %v971, 1.442695
        %v991 = vpow.pop %v990
        %v992 = vmul.f32 %v972, 1.442695
        %v993 = vpow.pop %v992
        %v994 = vmul.f32 %v973, 1.442695
        %v995 = vpow.pop %v994
        %v996 = vmul.f32 %v974, 1.442695
        %v997 = vpow.pop %v996
        %v998 = vmul.f32 %v975, 1.442695
        %v999 = vpow.pop %v998
        %v1000 = vmul.f32 %v976, 1.442695
        %v1001 = vpow.pop %v1000
        %v1002 = vmul.f32 %v977, 1.442695
        %v1003 = vpow.pop %v1002
        %v1004 = vmul.f32 %v978, 1.442695
        %v1005 = vpow.pop %v1004
        %v1006 = vmul.f32 %v979, 1.442695
        %v1007 = vpow.pop %v1006
        %v1008 = vmul.f32 %v980, 1.442695
        %v1009 = vpow.pop %v1008
        %v1010 = vmul.f32 %v981, 1.442695
        %v1011 = vpow.pop %v1010
        %v1012 = vmul.f32 %v982, 1.442695
        %v1013 = vpow.pop %v1012
        %v1014 = vmul.f32 %v983, 1.442695
        %v1015 = vpow.pop %v1014
        %v1016 = vadd.f32 %v985, %v993
        %v1017 = vadd.f32 %v987, %v995
        %v1018 = vadd.f32 %v989, %v997
        %v1019 = vadd.f32 %v991, %v999
        %v1020 = vadd.f32 %v1016, %v1001
        %v1021 = vadd.f32 %v1017, %v1003
        %v1022 = vadd.f32 %v1018, %v1005
        %v1023 = vadd.f32 %v1019, %v1007
        %v1024 = vadd.f32 %v1020, %v1009
        %v1025 = vadd.f32 %v1021, %v1011
        %v1026 = vadd.f32 %v1022, %v1013
        %v1027 = vadd.f32 %v1023, %v1015
        %v1028 = vrcp.pop %v1024
        %v1029 = vrcp.pop %v1025
        %v1030 = vrcp.pop %v1026
        %v1031 = vrcp.pop %v1027
        %v1032 = vmul.f32 %v985, %v1028
        %v1033 = vmul.f32 %v987, %v1029
        %v1034 = vmul.f32 %v989, %v1030
        %v1035 = vmul.f32 %v991, %v1031
        %v1036 = vmul.f32 %v993, %v1028
        %v1037 = vmul.f32 %v995, %v1029
        %v1038 = vmul.f32 %v997, %v1030
        %v1039 = vmul.f32 %v999, %v1031
        %v1040 = vmul.f32 %v1001, %v1028
        %v1041 = vmul.f32 %v1003, %v1029
        %v1042 = vmul.f32 %v1005, %v1030
        %v1043 = vmul.f32 %v1007, %v1031
        %v1044 = vmul.f32 %v1009, %v1028
        %v1045 = vmul.f32 %v1011, %v1029
        %v1046 = vmul.f32 %v1013, %v1030
        %v1047 = vmul.f32 %v1015, %v1031
        %v1048 = vpack.c.bf16 %v1033, %v1032
        %v1049 = vpack.c.bf16 %v1035, %v1034
        %v1050 = vpack.c.bf16 %v1037, %v1036
        %v1051 = vpack.c.bf16 %v1039, %v1038
        %v1052 = vpack.c.bf16 %v1041, %v1040
        %v1053 = vpack.c.bf16 %v1043, %v1042
        %v1054 = vpack.c.bf16 %v1045, %v1044
        %v1055 = vpack.c.bf16 %v1047, %v1046
        %v1056 = vld [vmem:[%s8] sm:$0x3]
        %vm1057 = vcmask 31744
        %v1059 = vsel %vm1057, %v1048, 0
        %v1062 = vsel %vm1057, %v1049, 0
        %v1065 = vsel %vm1057, %v1050, 0
        %v1068 = vsel %vm1057, %v1051, 0
        %v1071 = vsel %vm1057, %v1052, 0
        %v1074 = vsel %vm1057, %v1053, 0
        %v1077 = vsel %vm1057, %v1054, 0
        %v1080 = vsel %vm1057, %v1055, 0
        %vm1082 = vcmask 1041408
        %v1084 = vsel %vm1082, %v1056, 0
        %1086 = vmatprep.subr.bf16.mxu0 0
        %1087 = vmatpush1.bf16.msra.mxu0 %v1084
        %1088 = vmatprep.subr.bf16.mxu0 0
        %1089 = vmatpush1.bf16.msra.mxu0 0
        %1090 = vmatprep.subr.bf16.mxu0 0
        %1091 = vmatpush1.bf16.msra.mxu0 0
        %1092 = vmatprep.subr.bf16.mxu0 0
        %1093 = vmatpush1.bf16.msra.mxu0 0
        %1094 = vmatprep.subr.bf16.mxu0 0
        %1095 = vmatpush1.bf16.msra.mxu0 0
        %1096 = vmatprep.subr.bf16.mxu0 0
        %1097 = vmatpush1.bf16.msra.mxu0 0
        %1098 = vmatprep.subr.bf16.mxu0 0
        %1099 = vmatpush1.bf16.msra.mxu0 0
        %1100 = vmatprep.subr.bf16.mxu0 0
        %1101 = vmatpush1.bf16.msra.mxu0 0
        %1102 = vmatprep.subr.bf16.mxu0 0
        %1103 = vmatpush1.bf16.msra.mxu0 0
        %1104 = vmatprep.subr.bf16.mxu0 0
        %1105 = vmatpush1.bf16.msra.mxu0 0
        %1106 = vmatprep.subr.bf16.mxu0 0
        %1107 = vmatpush1.bf16.msra.mxu0 0
        %1108 = vmatprep.subr.bf16.mxu0 0
        %1109 = vmatpush1.bf16.msra.mxu0 0
        %1110 = vmatprep.subr.bf16.mxu0 0
        %1111 = vmatpush1.bf16.msra.mxu0 0
        %1112 = vmatprep.subr.bf16.mxu0 0
        %1113 = vmatpush1.bf16.msra.mxu0 0
        %1114 = vmatprep.subr.bf16.mxu0 0
        %1115 = vmatpush1.bf16.msra.mxu0 0
        %1116 = vmatprep.subr.bf16.mxu0 0
        %1117 = vmatpush1.bf16.msra.mxu0 0
        %1118 = vmatprep.mubr.bf16.mxu0 0
        %1119 = vmatmul.mubr.bf16.gmra.mrb[0].mxu0 %v1059
        %v1120 = vpop.f32.mrb[0].mxu0
        %v1121 = vadd.f32 0.0, %v1120
        %v1122 = vpop.f32.mrb[0].mxu0
        %v1123 = vpop.f32.mrb[0].mxu0
        %v1124 = vadd.f32 0.0, %v1123
        %v1125 = vpop.f32.mrb[0].mxu0
        %1126 = vmatprep.mubr.bf16.mxu0 0
        %1127 = vmatmul.mubr.bf16.gmra.mrb[0].mxu0 %v1062
        %v1128 = vpop.f32.mrb[0].mxu0
        %v1129 = vadd.f32 0.0, %v1128
        %v1130 = vpop.f32.mrb[0].mxu0
        %v1131 = vpop.f32.mrb[0].mxu0
        %v1132 = vadd.f32 0.0, %v1131
        %v1133 = vpop.f32.mrb[0].mxu0
        %1134 = vmatprep.mubr.bf16.mxu0 0
        %1135 = vmatmul.mubr.bf16.gmra.mrb[0].mxu0 %v1065
        %v1136 = vpop.f32.mrb[0].mxu0
        %v1137 = vadd.f32 0.0, %v1136
        %v1138 = vpop.f32.mrb[0].mxu0
        %v1139 = vpop.f32.mrb[0].mxu0
        %v1140 = vadd.f32 0.0, %v1139
        %v1141 = vpop.f32.mrb[0].mxu0
        %1142 = vmatprep.mubr.bf16.mxu0 0
        %1143 = vmatmul.mubr.bf16.gmra.mrb[0].mxu0 %v1068
        %v1144 = vpop.f32.mrb[0].mxu0
        %v1145 = vadd.f32 0.0, %v1144
        %v1146 = vpop.f32.mrb[0].mxu0
        %v1147 = vpop.f32.mrb[0].mxu0
        %v1148 = vadd.f32 0.0, %v1147
        %v1149 = vpop.f32.mrb[0].mxu0
        %1150 = vmatprep.mubr.bf16.mxu0 0
        %1151 = vmatmul.mubr.bf16.gmra.mrb[0].mxu0 %v1071
        %v1152 = vpop.f32.mrb[0].mxu0
        %v1153 = vadd.f32 0.0, %v1152
        %v1154 = vpop.f32.mrb[0].mxu0
        %v1155 = vpop.f32.mrb[0].mxu0
        %v1156 = vadd.f32 0.0, %v1155
        %v1157 = vpop.f32.mrb[0].mxu0
        %1158 = vmatprep.mubr.bf16.mxu0 0
        %1159 = vmatmul.mubr.bf16.gmra.mrb[0].mxu0 %v1074
        %v1160 = vpop.f32.mrb[0].mxu0
        %v1161 = vadd.f32 0.0, %v1160
        %v1162 = vpop.f32.mrb[0].mxu0
        %v1163 = vpop.f32.mrb[0].mxu0
        %v1164 = vadd.f32 0.0, %v1163
        %v1165 = vpop.f32.mrb[0].mxu0
        %1166 = vmatprep.mubr.bf16.mxu0 0
        %1167 = vmatmul.mubr.bf16.gmra.mrb[0].mxu0 %v1077
        %v1168 = vpop.f32.mrb[0].mxu0
        %v1169 = vadd.f32 0.0, %v1168
        %v1170 = vpop.f32.mrb[0].mxu0
        %v1171 = vpop.f32.mrb[0].mxu0
        %v1172 = vadd.f32 0.0, %v1171
        %v1173 = vpop.f32.mrb[0].mxu0
        %1174 = vmatprep.mubr.bf16.mxu0 0
        %1175 = vmatmul.mubr.bf16.gmra.mrb[0].mxu0 %v1080
        %v1176 = vpop.f32.mrb[0].mxu0
        %v1177 = vadd.f32 0.0, %v1176
        %v1178 = vpop.f32.mrb[0].mxu0
        %v1179 = vpop.f32.mrb[0].mxu0
        %v1180 = vadd.f32 0.0, %v1179
        %v1181 = vpop.f32.mrb[0].mxu0
        %1182 = vdwg.mxu0
        %1199 = vrot.lane.b32.xlu0 %v672, 64
        %v1200 = vpop.permute.xlu0 %1199
        %1201 = vrot.lane.b32.xlu0 %v675, 64
        %v1202 = vpop.permute.xlu0 %1201
        %1203 = vrot.lane.b32.xlu0 %v680, 64
        %v1204 = vpop.permute.xlu0 %1203
        %1205 = vrot.lane.b32.xlu0 %v683, 64
        %v1206 = vpop.permute.xlu0 %1205
        %1207 = vrot.lane.b32.xlu0 %v688, 64
        %v1208 = vpop.permute.xlu0 %1207
        %1209 = vrot.lane.b32.xlu0 %v691, 64
        %v1210 = vpop.permute.xlu0 %1209
        %1211 = vrot.lane.b32.xlu0 %v696, 64
        %v1212 = vpop.permute.xlu0 %1211
        %1213 = vrot.lane.b32.xlu0 %v699, 64
        %v1214 = vpop.permute.xlu0 %1213
        %1215 = vrot.lane.b32.xlu0 %v704, 64
        %v1216 = vpop.permute.xlu0 %1215
        %1217 = vrot.lane.b32.xlu0 %v707, 64
        %v1218 = vpop.permute.xlu0 %1217
        %1219 = vrot.lane.b32.xlu0 %v712, 64
        %v1220 = vpop.permute.xlu0 %1219
        %1221 = vrot.lane.b32.xlu0 %v715, 64
        %v1222 = vpop.permute.xlu0 %1221
        %1223 = vrot.lane.b32.xlu0 %v720, 64
        %v1224 = vpop.permute.xlu0 %1223
        %1225 = vrot.lane.b32.xlu0 %v723, 64
        %v1226 = vpop.permute.xlu0 %1225
        %1227 = vrot.lane.b32.xlu0 %v728, 64
        %v1228 = vpop.permute.xlu0 %1227
        %1229 = vrot.lane.b32.xlu0 %v731, 64
        %v1230 = vpop.permute.xlu0 %1229
        %v1247 = vmul.f32 %v1121, %v1200
        %v1248 = vmul.f32 %v1124, %v1202
        %v1249 = vmul.f32 %v1129, %v1204
        %v1250 = vmul.f32 %v1132, %v1206
        %v1251 = vmul.f32 %v1137, %v1208
        %v1252 = vmul.f32 %v1140, %v1210
        %v1253 = vmul.f32 %v1145, %v1212
        %v1254 = vmul.f32 %v1148, %v1214
        %v1255 = vmul.f32 %v1153, %v1216
        %v1256 = vmul.f32 %v1156, %v1218
        %v1257 = vmul.f32 %v1161, %v1220
        %v1258 = vmul.f32 %v1164, %v1222
        %v1259 = vmul.f32 %v1169, %v1224
        %v1260 = vmul.f32 %v1172, %v1226
        %v1261 = vmul.f32 %v1177, %v1228
        %v1262 = vmul.f32 %v1180, %v1230
        %v1263 = vadd.f32 %v1247, %v1251
        %v1264 = vadd.f32 %v1248, %v1252
        %v1265 = vadd.f32 %v1249, %v1253
        %v1266 = vadd.f32 %v1250, %v1254
        %v1267 = vadd.f32 %v1263, %v1255
        %v1268 = vadd.f32 %v1264, %v1256
        %v1269 = vadd.f32 %v1265, %v1257
        %v1270 = vadd.f32 %v1266, %v1258
        %v1271 = vadd.f32 %v1267, %v1259
        %v1272 = vadd.f32 %v1268, %v1260
        %v1273 = vadd.f32 %v1269, %v1261
        %v1274 = vadd.f32 %v1270, %v1262
        %v1275 = vpack.c.bf16 %v1272, %v1271
        %v1276 = vpack.c.bf16 %v1274, %v1273
        %v1277 = vld [vmem:[%s5] sm:$0xf]
        %v1278 = vld [vmem:[%s5 + $0x4] sm:$0xf]
        %v1279 = vld [vmem:[%s5 + $0x8] sm:$0xf]
        %v1280 = vld [vmem:[%s5 + $0xc] sm:$0xf]
        %v1281 = vld [vmem:[%s5 + $0x10] sm:$0xf]
        %v1282 = vld [vmem:[%s5 + $0x14] sm:$0xf]
        %v1283 = vld [vmem:[%s5 + $0x18] sm:$0xf]
        %v1284 = vld [vmem:[%s5 + $0x1c] sm:$0xf]
        %v1285 = vld [vmem:[%s6] sm:$0x1]
        %v1287 = vlaneseq
        %v1288 = vshrl.u32 %v1287, 7
        %v1289 = vsub.s32 0, %v1288
        %v1290 = vrot.slane %v1285, %v1289
        %v1300 = vunpack.c.l.b16 %v1277
        %v1301 = vunpack.c.l.b16 %v1278
        %v1302 = vunpack.c.l.b16 %v1279
        %v1303 = vunpack.c.l.b16 %v1280
        %v1304 = vunpack.c.l.b16 %v1281
        %v1305 = vunpack.c.l.b16 %v1282
        %v1306 = vunpack.c.l.b16 %v1283
        %v1307 = vunpack.c.l.b16 %v1284
        %v1308 = vpack.c.b16 %v1301, %v1300
        %v1309 = vpack.c.b16 %v1303, %v1302
        %v1310 = vpack.c.b16 %v1305, %v1304
        %v1311 = vpack.c.b16 %v1307, %v1306
        %v1317 = vsel %vm790, %v1275, 0
        %v1320 = vsel %vm790, %v1276, 0
        %1322 = vmatprep.subr.bf16.mxu0 0
        %1323 = vmatpush1.bf16.msra.mxu0 %v1308
        %1324 = vmatprep.subr.bf16.mxu0 0
        %1325 = vmatpush1.bf16.msra.mxu0 %v1309
        %1326 = vmatprep.subr.bf16.mxu0 0
        %1327 = vmatpush1.bf16.msra.mxu0 %v1310
        %1328 = vmatprep.subr.bf16.mxu0 0
        %1329 = vmatpush1.bf16.msra.mxu0 %v1311
        %1330 = vmatprep.subr.bf16.mxu0 0
        %1331 = vmatpush1.bf16.msra.mxu0 0
        %1332 = vmatprep.subr.bf16.mxu0 0
        %1333 = vmatpush1.bf16.msra.mxu0 0
        %1334 = vmatprep.subr.bf16.mxu0 0
        %1335 = vmatpush1.bf16.msra.mxu0 0
        %1336 = vmatprep.subr.bf16.mxu0 0
        %1337 = vmatpush1.bf16.msra.mxu0 0
        %1338 = vmatprep.subr.bf16.mxu0 0
        %1339 = vmatpush1.bf16.msra.mxu0 0
        %1340 = vmatprep.subr.bf16.mxu0 0
        %1341 = vmatpush1.bf16.msra.mxu0 0
        %1342 = vmatprep.subr.bf16.mxu0 0
        %1343 = vmatpush1.bf16.msra.mxu0 0
        %1344 = vmatprep.subr.bf16.mxu0 0
        %1345 = vmatpush1.bf16.msra.mxu0 0
        %1346 = vmatprep.subr.bf16.mxu0 0
        %1347 = vmatpush1.bf16.msra.mxu0 0
        %1348 = vmatprep.subr.bf16.mxu0 0
        %1349 = vmatpush1.bf16.msra.mxu0 0
        %1350 = vmatprep.subr.bf16.mxu0 0
        %1351 = vmatpush1.bf16.msra.mxu0 0
        %1352 = vmatprep.subr.bf16.mxu0 0
        %1353 = vmatpush1.bf16.msra.mxu0 0
        %1354 = vmatprep.mubr.bf16.mxu0 0
        %1355 = vmatmul.mubr.bf16.gmra.mrb[0].mxu0 %v1317
        %v1356 = vpop.f32.mrb[0].mxu0
        %v1357 = vadd.f32 %v1290, %v1356
        %v1358 = vpop.f32.mrb[0].mxu0
        %v1359 = vpop.f32.mrb[0].mxu0
        %v1360 = vadd.f32 %v1290, %v1359
        %v1361 = vpop.f32.mrb[0].mxu0
        %1362 = vmatprep.mubr.bf16.mxu0 0
        %1363 = vmatmul.mubr.bf16.gmra.mrb[0].mxu0 %v1320
        %v1364 = vpop.f32.mrb[0].mxu0
        %v1365 = vadd.f32 %v1290, %v1364
        %v1366 = vpop.f32.mrb[0].mxu0
        %v1367 = vpop.f32.mrb[0].mxu0
        %v1368 = vadd.f32 %v1290, %v1367
        %v1369 = vpop.f32.mrb[0].mxu0
        %1370 = vdwg.mxu0
        %1371 = vst.msk [vmem:[%s451] sm:$0xff] %vm508, %v1357
        %1372 = vst.msk [vmem:[%s451 + $0x8] sm:$0xff] %vm508, %v1360
        %1373 = vst.msk [vmem:[%s451 + $0x10] sm:$0xff] %vm508, %v1365
        %1374 = vst.msk [vmem:[%s451 + $0x18] sm:$0xff] %vm508, %v1368
        %s1375 = sand.u32 %s230, 1
        %s1376 = scalar_lea.sflag [#allocation4], %s1375
        %s1377 = sand.u32 %s230, 1
        %s1378 = smul.addr %s1377, 32
        %s1379 = scalar_lea.vmem [#allocation3], %s1378
        // Predicated region
        $region98: #{decoy_pointwise_attention.1} parent=92 // pred_check
          %p1380 = pneg %p240
        $region99: #{decoy_pointwise_attention.1} parent=92 // pred_check_branch
          %1382 = sbr.rel (%p1380) target = $region101
        $region100: #{decoy_pointwise_attention.1} parent=92 // pred_region
          %s1383 = smul.u32 2, %s23
          %s1385 = ssub.s32 512, 512
          %1386 = vsyncadd %s1376, %s1385
          %s1387 = smul.addr %s1383, 2
          %s1388 = smul.addr %s1387, 128
          %s1389 = scalar_lea.hbm %s9, %s1388
          %s1390 = sshll.u32 %s1379, 4
          %s1391 = int_to_ptr.vmem [resolvable:$true] %s1390
          %1396 = dma.vmem_to_hbm [thread:$0]  %s1391, 512, %s1389, %s1376, 128, 128, 8
        $region101: #{decoy_pointwise_attention.1} parent=92 // pred_fallthru
          _
      $region93: #{decoy_pointwise_attention.1} parent=5 // pred_fallthru
        _
      %p1397 = scmp.le.s32.totalorder 2, %s18
      // Predicated region
      $region102: #{decoy_pointwise_attention.1} parent=5 // pred_check
        %p1398 = pneg %p1397
      $region103: #{decoy_pointwise_attention.1} parent=5 // pred_check_branch
        %1400 = sbr.rel (%p1398) target = $region105
      $region104: #{decoy_pointwise_attention.1} parent=5 // pred_region
        %s1401 = ssub.s32 %s18, 2
        // Predicated region
        $region106: #{decoy_pointwise_attention.1} parent=104 // pred_check
          %p1402 = pneg %p246
        $region107: #{decoy_pointwise_attention.1} parent=104 // pred_check_branch
          %1404 = sbr.rel (%p1402) target = $region109
        $region108: #{decoy_pointwise_attention.1} parent=104 // pred_region
          %s1405 = sand.u32 %s231, 1
          %s1406 = scalar_lea.sflag [#allocation4], %s1405
          %s1407 = sand.u32 %s231, 1
          %s1408 = smul.addr %s1407, 32
          %s1409 = scalar_lea.vmem [#allocation3], %s1408
          %1410 = dma.done %s1406, 512
        $region109: #{decoy_pointwise_attention.1} parent=104 // pred_fallthru
          _
      $region105: #{decoy_pointwise_attention.1} parent=5 // pred_fallthru
        _
    $region6: #{decoy_pointwise_attention.1} parent=1 // loop_footer
      %s22 = sadd.s32 1, %s18
    $region7: #{decoy_pointwise_attention.1} parent=1 // loop_footer_branch
      %17 = sbr.rel target = $region3
    $region8: #{decoy_pointwise_attention.1} parent=1 // loop_exit
      _
    %1411 = vsyncpa [#allocation4], 1
    %s1412 = scalar_lea.sflag [#allocation4], 1
    %1413 = vsyncpa %s1412, 1

</llo_original>
